<compile_context>
chip_gen: v7x
topology: tpu7x:2x2x1
jax: 0.10.0
libtpu: 0.0.40
codegen_flags: <defaults>
</compile_context>

<pallas_src>
import functools

import jax
import jax.numpy as jnp
from jax.experimental import pallas as pl
from jax.experimental.pallas import tpu as pltpu


def _gelu_tanh(v):
    # TODO(synk): nn.GELU() defaults to the exact erf formulation; Mosaic does
    # not guarantee an erf lowering, so the kernel uses the tanh approximation
    # (|error| <= ~1e-3, routed to the otherwise-idle EUP slot).
    c = 0.7978845608028654  # sqrt(2/pi)
    return 0.5 * v * (1.0 + jnp.tanh(c * (v + 0.044715 * v * v * v)))


def _layernorm(v, gamma, beta, eps=1e-5):
    mu = jnp.mean(v, axis=-1, keepdims=True)
    var = jnp.mean((v - mu) * (v - mu), axis=-1, keepdims=True)
    return (v - mu) * jax.lax.rsqrt(var + eps) * gamma + beta


def mixer_kernel(x_ref,
                 g1_ref, be1_ref, g2_ref, be2_ref,
                 w1a_ref, b1a_ref, w1b_ref, b1b_ref,
                 w2aT_ref, b2a_ref, w2bT_ref, b2b_ref,
                 o_ref, *, group_dim, channel_dim):
    G, C = group_dim, channel_dim
    tb = x_ref.shape[0]
    f32 = jnp.float32

    gamma1, beta1 = g1_ref[...], be1_ref[...]
    gamma2, beta2 = g2_ref[...], be2_ref[...]

    # ---- branch 1: token mixing over the group dim ---------------------------
    # Group g of each sample row lives in lanes [g*C, (g+1)*C): per-group views
    # are static, 128-aligned lane slices (no strides, no relayout, no padding).
    xs = [x_ref[:, g * C:(g + 1) * C].astype(f32) for g in range(G)]   # G x (tb, C)
    ys = [_layernorm(xg, gamma1, beta1) for xg in xs]

    # G is tiny (module default 4): a (G, G) MXU matmul would be ~empty, so do
    # G*G scalar-broadcast FMAs on the VPU with SMEM scalar weights
    # (PyTorch (out, in) layout).
    ts = []
    for k in range(G):
        acc = ys[0] * w1a_ref[k, 0]
        for j in range(1, G):
            acc = acc + ys[j] * w1a_ref[k, j]
        ts.append(_gelu_tanh(acc + b1a_ref[k]))
    x1s = []
    for g in range(G):
        acc = ts[0] * w1b_ref[g, 0]
        for k in range(1, G):
            acc = acc + ts[k] * w1b_ref[g, k]
        x1s.append(xs[g] + acc + b1b_ref[g])                           # residual (fp32)

    # ---- branch 2: channel mixing over channel_dim (MXU, groups folded in M) -
    x1 = jnp.concatenate(x1s, axis=0)                                  # (G*tb, C) fp32
    y2 = _layernorm(x1, gamma2, beta2)
    h = jnp.dot(y2.astype(jnp.bfloat16), w2aT_ref[...],
                preferred_element_type=f32) + b2a_ref[...]
    h = _gelu_tanh(h)
    h = jnp.dot(h.astype(jnp.bfloat16), w2bT_ref[...],
                preferred_element_type=f32) + b2b_ref[...]
    out = x1 + h                                                       # (G*tb, C) fp32

    # Write back per-group lane chunks: dense, 128-aligned, unmasked stores.
    for g in range(G):
        o_ref[:, g * C:(g + 1) * C] = out[g * tb:(g + 1) * tb].astype(o_ref.dtype)


def _vmem_bytes(tb, G, C, act_bytes=2):
    """Rough VMEM need: double-buffered bf16 in/out blocks, ~6 block-sized fp32
    temporaries, double-buffered bf16 (C,C) weights, small params."""
    block = tb * G * C
    act = block * act_bytes * 2 * 2          # x + out blocks, double-buffered
    temps = block * 4 * 6                    # fp32 block-sized temporaries
    weights = 2 * C * C * 2 * 2              # two (C,C) bf16 weights, double-buffered
    params = 16 * C * 4 + 4 * 1024           # LN params, biases, SMEM tables
    return act + temps + weights + params


def _choose_tb(B, G, C, *, act_bytes=2, vmem_budget_bytes=28 << 20):
    """Largest batch-block whose kernel-resident data stays in budget, preferring
    >=6 pipelined grid steps (>=3 per v7x core) and 8-sublane-aligned blocks."""
    per_row = G * C * (2 * 2 * act_bytes + 6 * 4)
    cap = max(1, vmem_budget_bytes // per_row)
    divisors = [d for d in range(1, B + 1) if B % d == 0 and d <= cap]
    for min_steps in (6, 4, 3, 2):
        cands = [d for d in divisors if B // d >= min_steps and d % 8 == 0]
        if cands:
            return max(cands)
    if B <= cap:
        return B                              # single step; block == full array dims
    return max(divisors)


def mlp_mixer_block(x, params, *, tb=None, out_dtype=jnp.bfloat16):
    """x: (B, G, C) float. Returns (B, G, C) in `out_dtype` (bf16 by default)."""
    B, G, C = x.shape
    f32, bf16 = jnp.float32, jnp.bfloat16
    if tb is None:
        tb = _choose_tb(B, G, C)
    assert B % tb == 0, (B, tb)

    # bf16 activations in HBM; (B, G, C) -> (B, G*C) is a metadata-only reshape.
    x2d = x.reshape(B, G * C).astype(bf16)

    def const_spec(shape):
        return pl.BlockSpec(shape, lambda i: (0, 0))

    smem = pl.BlockSpec(memory_space=pltpu.MemorySpace.SMEM)

    ln_args = (params["g1"].reshape(1, C).astype(f32),
               params["be1"].reshape(1, C).astype(f32),
               params["g2"].reshape(1, C).astype(f32),
               params["be2"].reshape(1, C).astype(f32))
    # mlp1: PyTorch (out, in) weights + 1-D biases, read as scalars from SMEM.
    mlp1_args = (params["w1a"].astype(f32), params["b1a"].astype(f32),
                 params["w1b"].astype(f32), params["b1b"].astype(f32))
    # mlp2: transposed (in, out) bf16 weights for the MXU + (1, C) fp32 biases.
    mlp2_args = (params["w2a"].T.astype(bf16),
                 params["b2a"].reshape(1, C).astype(f32),
                 params["w2b"].T.astype(bf16),
                 params["b2b"].reshape(1, C).astype(f32))

    in_specs = ([pl.BlockSpec((tb, G * C), lambda i: (i, 0))]
                + [const_spec((1, C))] * 4
                + [smem] * 4
                + [const_spec((C, C)), const_spec((1, C)),
                   const_spec((C, C)), const_spec((1, C))])

    grid_spec = pltpu.PrefetchScalarGridSpec(
        num_scalar_prefetch=0,
        grid=(B // tb,),
        in_specs=in_specs,
        out_specs=pl.BlockSpec((tb, G * C), lambda i: (i, 0)),
    )

    # Actual need (x2) capped at 48 MiB so v7x's 64 MiB/core keeps headroom.
    vmem_limit = int(min(48 << 20, max(2 * _vmem_bytes(tb, G, C), 16 << 20)))
    cost = pl.CostEstimate(
        flops=4 * B * G * C * C + 4 * B * C * G * G + 12 * B * G * C,
        transcendentals=2 * B * G * C,
        bytes_accessed=2 * B * G * C * 2 + 4 * C * C + 2 * G * G * 4 + 16 * C * 4,
    )

    kernel = functools.partial(mixer_kernel, group_dim=G, channel_dim=C)
    out2d = pl.pallas_call(
        kernel,
        out_shape=jax.ShapeDtypeStruct((B, G * C), out_dtype),
        grid_spec=grid_spec,
        compiler_params=pltpu.CompilerParams(
            dimension_semantics=("parallel",),
            vmem_limit_bytes=vmem_limit,
        ),
        cost_estimate=cost,
    )(x2d, *ln_args, *mlp1_args, *mlp2_args)
    return out2d.reshape(B, G, C)


def init_params(key, channel_dim, group_dim):
    ks = jax.random.split(key, 12)
    sg = 1.0 / jnp.sqrt(group_dim)
    sc = 1.0 / jnp.sqrt(channel_dim)
    u = lambda k, shape, s: jax.random.uniform(k, shape, jnp.float32, -s, s)
    return {
        # LayerNorms (perturbed from the ones/zeros default to exercise the path)
        "g1": 1.0 + 0.1 * jax.random.normal(ks[8], (channel_dim,), jnp.float32),
        "be1": 0.1 * jax.random.normal(ks[9], (channel_dim,), jnp.float32),
        "g2": 1.0 + 0.1 * jax.random.normal(ks[10], (channel_dim,), jnp.float32),
        "be2": 0.1 * jax.random.normal(ks[11], (channel_dim,), jnp.float32),
        # mlp1 (over group_dim): Linear weights stored PyTorch-style (out, in)
        "w1a": u(ks[0], (group_dim, group_dim), sg),
        "b1a": u(ks[1], (group_dim,), sg),
        "w1b": u(ks[2], (group_dim, group_dim), sg),
        "b1b": u(ks[3], (group_dim,), sg),
        # mlp2 (over channel_dim)
        "w2a": u(ks[4], (channel_dim, channel_dim), sc),
        "b2a": u(ks[5], (channel_dim,), sc),
        "w2b": u(ks[6], (channel_dim, channel_dim), sc),
        "b2b": u(ks[7], (channel_dim,), sc),
    }


def reference(x, p):
    """Plain-JAX fp32 mirror of the PyTorch forward (exact erf GELU)."""
    def ln(v, g, b):
        mu = jnp.mean(v, -1, keepdims=True)
        var = jnp.mean((v - mu) ** 2, -1, keepdims=True)
        return (v - mu) / jnp.sqrt(var + 1e-5) * g + b

    gelu = functools.partial(jax.nn.gelu, approximate=False)
    # branch 1: norm1 -> transpose -> mlp1 -> transpose, residual
    y = ln(x, p["g1"], p["be1"])
    yt = jnp.swapaxes(y, 1, 2)                                   # (B, C, G)
    yt = gelu(yt @ p["w1a"].T + p["b1a"]) @ p["w1b"].T + p["b1b"]
    x = x + jnp.swapaxes(yt, 1, 2)
    # branch 2: norm2 -> mlp2, residual
    y2 = ln(x, p["g2"], p["be2"])
    y2 = gelu(y2 @ p["w2a"].T + p["b2a"]) @ p["w2b"].T + p["b2b"]
    return x + y2


if __name__ == "__main__":
    # Small but hardware-friendly shapes: group_dim is the module default,
    # channel_dim a multiple of 128 (lane width G*C = 512 is lane-dense),
    # batch gives an 8-step parallel grid (tb = 32, M = 128 per matmul).
    B, group_dim, channel_dim = 256, 4, 128
    key = jax.random.PRNGKey(0)
    kx, kp = jax.random.split(key)
    x = jax.random.normal(kx, (B, group_dim, channel_dim), jnp.float32)
    params = init_params(kp, channel_dim, group_dim)

    out = jax.block_until_ready(mlp_mixer_block(x, params))
    ref = reference(x, params)
    assert out.shape == (B, group_dim, channel_dim)
    # bf16 activations/MXU operands + tanh-GELU vs an all-fp32 erf reference.
    assert jnp.allclose(out.astype(jnp.float32), ref, atol=6e-2, rtol=6e-2), \
        "mismatch vs JAX reference"
    print("KERNEL_OK")
</pallas_src>

<mosaic_0001>
module attributes {stable_mosaic.version = 11 : i64} {
  func.func @mixer_kernel(%arg0: i32, %arg1: memref<32x512xbf16, #tpu.memory_space<vmem>>, %arg2: memref<1x128xf32, #tpu.memory_space<vmem>>, %arg3: memref<1x128xf32, #tpu.memory_space<vmem>>, %arg4: memref<1x128xf32, #tpu.memory_space<vmem>>, %arg5: memref<1x128xf32, #tpu.memory_space<vmem>>, %arg6: memref<4x4xf32, #tpu.memory_space<smem>>, %arg7: memref<4xf32, #tpu.memory_space<smem>>, %arg8: memref<4x4xf32, #tpu.memory_space<smem>>, %arg9: memref<4xf32, #tpu.memory_space<smem>>, %arg10: memref<128x128xbf16, #tpu.memory_space<vmem>>, %arg11: memref<1x128xf32, #tpu.memory_space<vmem>>, %arg12: memref<128x128xbf16, #tpu.memory_space<vmem>>, %arg13: memref<1x128xf32, #tpu.memory_space<vmem>>, %arg14: memref<32x512xbf16, #tpu.memory_space<vmem>>) attributes {dimension_semantics = [#tpu.dimension_semantics<parallel>], iteration_bounds = array<i64: 8>, scalar_prefetch = 0 : i64, scratch_operands = 0 : i64, tpu.core_type = #tpu.core_type<tc>, window_params = [{transform_indices = @transform_0, window_bounds = array<i64: 32, 512>}, {pipeline_mode = #tpu.pipeline_mode<synchronous>, transform_indices = @transform_1, window_bounds = array<i64: 1, 128>}, {pipeline_mode = #tpu.pipeline_mode<synchronous>, transform_indices = @transform_2, window_bounds = array<i64: 1, 128>}, {pipeline_mode = #tpu.pipeline_mode<synchronous>, transform_indices = @transform_3, window_bounds = array<i64: 1, 128>}, {pipeline_mode = #tpu.pipeline_mode<synchronous>, transform_indices = @transform_4, window_bounds = array<i64: 1, 128>}, {transform_indices = @transform_5, window_bounds = array<i64: 4, 4>}, {transform_indices = @transform_6, window_bounds = array<i64: 4>}, {transform_indices = @transform_7, window_bounds = array<i64: 4, 4>}, {transform_indices = @transform_8, window_bounds = array<i64: 4>}, {pipeline_mode = #tpu.pipeline_mode<synchronous>, transform_indices = @transform_9, window_bounds = array<i64: 128, 128>}, {pipeline_mode = #tpu.pipeline_mode<synchronous>, transform_indices = @transform_10, window_bounds = array<i64: 1, 128>}, {pipeline_mode = #tpu.pipeline_mode<synchronous>, transform_indices = @transform_11, window_bounds = array<i64: 128, 128>}, {pipeline_mode = #tpu.pipeline_mode<synchronous>, transform_indices = @transform_12, window_bounds = array<i64: 1, 128>}, {transform_indices = @transform_13, window_bounds = array<i64: 32, 512>}]} {
    %c0 = arith.constant 0 : index
    %c0_0 = arith.constant 0 : index
    %0 = vector.load %arg2[%c0, %c0_0] : memref<1x128xf32, #tpu.memory_space<vmem>>, vector<1x128xf32>
    %c0_1 = arith.constant 0 : index
    %c0_2 = arith.constant 0 : index
    %1 = vector.load %arg3[%c0_1, %c0_2] : memref<1x128xf32, #tpu.memory_space<vmem>>, vector<1x128xf32>
    %c0_3 = arith.constant 0 : index
    %c0_4 = arith.constant 0 : index
    %2 = vector.load %arg4[%c0_3, %c0_4] : memref<1x128xf32, #tpu.memory_space<vmem>>, vector<1x128xf32>
    %c0_5 = arith.constant 0 : index
    %c0_6 = arith.constant 0 : index
    %3 = vector.load %arg5[%c0_5, %c0_6] : memref<1x128xf32, #tpu.memory_space<vmem>>, vector<1x128xf32>
    %c0_7 = arith.constant 0 : index
    %c0_8 = arith.constant 0 : index
    %4 = vector.load %arg1[%c0_7, %c0_8] : memref<32x512xbf16, #tpu.memory_space<vmem>>, vector<32x128xbf16>
    %5 = arith.extf %4 : vector<32x128xbf16> to vector<32x128xf32>
    %c0_9 = arith.constant 0 : index
    %c128 = arith.constant 128 : index
    %6 = vector.load %arg1[%c0_9, %c128] : memref<32x512xbf16, #tpu.memory_space<vmem>>, vector<32x128xbf16>
    %7 = arith.extf %6 : vector<32x128xbf16> to vector<32x128xf32>
    %c0_10 = arith.constant 0 : index
    %c256 = arith.constant 256 : index
    %8 = vector.load %arg1[%c0_10, %c256] : memref<32x512xbf16, #tpu.memory_space<vmem>>, vector<32x128xbf16>
    %9 = arith.extf %8 : vector<32x128xbf16> to vector<32x128xf32>
    %c0_11 = arith.constant 0 : index
    %c384 = arith.constant 384 : index
    %10 = vector.load %arg1[%c0_11, %c384] : memref<32x512xbf16, #tpu.memory_space<vmem>>, vector<32x128xbf16>
    %11 = arith.extf %10 : vector<32x128xbf16> to vector<32x128xf32>
    %cst = arith.constant dense<0.000000e+00> : vector<32xf32>
    %12 = vector.multi_reduction <add>, %5, %cst [1] : vector<32x128xf32> to vector<32xf32>
    %13 = vector.shape_cast %12 : vector<32xf32> to vector<32x1xf32>
    %cst_12 = arith.constant 1.280000e+02 : f32
    %14 = vector.broadcast %cst_12 : f32 to vector<32x1xf32>
    %15 = arith.divf %13, %14 : vector<32x1xf32>
    %16 = vector.broadcast %15 : vector<32x1xf32> to vector<32x128xf32>
    %17 = arith.subf %5, %16 : vector<32x128xf32>
    %18 = vector.broadcast %15 : vector<32x1xf32> to vector<32x128xf32>
    %19 = arith.subf %5, %18 : vector<32x128xf32>
    %20 = arith.mulf %17, %19 : vector<32x128xf32>
    %cst_13 = arith.constant dense<0.000000e+00> : vector<32xf32>
    %21 = vector.multi_reduction <add>, %20, %cst_13 [1] : vector<32x128xf32> to vector<32xf32>
    %22 = vector.shape_cast %21 : vector<32xf32> to vector<32x1xf32>
    %cst_14 = arith.constant 1.280000e+02 : f32
    %23 = vector.broadcast %cst_14 : f32 to vector<32x1xf32>
    %24 = arith.divf %22, %23 : vector<32x1xf32>
    %25 = vector.broadcast %15 : vector<32x1xf32> to vector<32x128xf32>
    %26 = arith.subf %5, %25 : vector<32x128xf32>
    %cst_15 = arith.constant 9.99999974E-6 : f32
    %27 = vector.broadcast %cst_15 : f32 to vector<32x1xf32>
    %28 = arith.addf %24, %27 : vector<32x1xf32>
    %29 = math.rsqrt %28 : vector<32x1xf32>
    %30 = vector.broadcast %29 : vector<32x1xf32> to vector<32x128xf32>
    %31 = arith.mulf %26, %30 : vector<32x128xf32>
    %32 = vector.broadcast %0 : vector<1x128xf32> to vector<32x128xf32>
    %33 = arith.mulf %31, %32 : vector<32x128xf32>
    %34 = vector.broadcast %1 : vector<1x128xf32> to vector<32x128xf32>
    %35 = arith.addf %33, %34 : vector<32x128xf32>
    %cst_16 = arith.constant dense<0.000000e+00> : vector<32xf32>
    %36 = vector.multi_reduction <add>, %7, %cst_16 [1] : vector<32x128xf32> to vector<32xf32>
    %37 = vector.shape_cast %36 : vector<32xf32> to vector<32x1xf32>
    %cst_17 = arith.constant 1.280000e+02 : f32
    %38 = vector.broadcast %cst_17 : f32 to vector<32x1xf32>
    %39 = arith.divf %37, %38 : vector<32x1xf32>
    %40 = vector.broadcast %39 : vector<32x1xf32> to vector<32x128xf32>
    %41 = arith.subf %7, %40 : vector<32x128xf32>
    %42 = vector.broadcast %39 : vector<32x1xf32> to vector<32x128xf32>
    %43 = arith.subf %7, %42 : vector<32x128xf32>
    %44 = arith.mulf %41, %43 : vector<32x128xf32>
    %cst_18 = arith.constant dense<0.000000e+00> : vector<32xf32>
    %45 = vector.multi_reduction <add>, %44, %cst_18 [1] : vector<32x128xf32> to vector<32xf32>
    %46 = vector.shape_cast %45 : vector<32xf32> to vector<32x1xf32>
    %cst_19 = arith.constant 1.280000e+02 : f32
    %47 = vector.broadcast %cst_19 : f32 to vector<32x1xf32>
    %48 = arith.divf %46, %47 : vector<32x1xf32>
    %49 = vector.broadcast %39 : vector<32x1xf32> to vector<32x128xf32>
    %50 = arith.subf %7, %49 : vector<32x128xf32>
    %cst_20 = arith.constant 9.99999974E-6 : f32
    %51 = vector.broadcast %cst_20 : f32 to vector<32x1xf32>
    %52 = arith.addf %48, %51 : vector<32x1xf32>
    %53 = math.rsqrt %52 : vector<32x1xf32>
    %54 = vector.broadcast %53 : vector<32x1xf32> to vector<32x128xf32>
    %55 = arith.mulf %50, %54 : vector<32x128xf32>
    %56 = vector.broadcast %0 : vector<1x128xf32> to vector<32x128xf32>
    %57 = arith.mulf %55, %56 : vector<32x128xf32>
    %58 = vector.broadcast %1 : vector<1x128xf32> to vector<32x128xf32>
    %59 = arith.addf %57, %58 : vector<32x128xf32>
    %cst_21 = arith.constant dense<0.000000e+00> : vector<32xf32>
    %60 = vector.multi_reduction <add>, %9, %cst_21 [1] : vector<32x128xf32> to vector<32xf32>
    %61 = vector.shape_cast %60 : vector<32xf32> to vector<32x1xf32>
    %cst_22 = arith.constant 1.280000e+02 : f32
    %62 = vector.broadcast %cst_22 : f32 to vector<32x1xf32>
    %63 = arith.divf %61, %62 : vector<32x1xf32>
    %64 = vector.broadcast %63 : vector<32x1xf32> to vector<32x128xf32>
    %65 = arith.subf %9, %64 : vector<32x128xf32>
    %66 = vector.broadcast %63 : vector<32x1xf32> to vector<32x128xf32>
    %67 = arith.subf %9, %66 : vector<32x128xf32>
    %68 = arith.mulf %65, %67 : vector<32x128xf32>
    %cst_23 = arith.constant dense<0.000000e+00> : vector<32xf32>
    %69 = vector.multi_reduction <add>, %68, %cst_23 [1] : vector<32x128xf32> to vector<32xf32>
    %70 = vector.shape_cast %69 : vector<32xf32> to vector<32x1xf32>
    %cst_24 = arith.constant 1.280000e+02 : f32
    %71 = vector.broadcast %cst_24 : f32 to vector<32x1xf32>
    %72 = arith.divf %70, %71 : vector<32x1xf32>
    %73 = vector.broadcast %63 : vector<32x1xf32> to vector<32x128xf32>
    %74 = arith.subf %9, %73 : vector<32x128xf32>
    %cst_25 = arith.constant 9.99999974E-6 : f32
    %75 = vector.broadcast %cst_25 : f32 to vector<32x1xf32>
    %76 = arith.addf %72, %75 : vector<32x1xf32>
    %77 = math.rsqrt %76 : vector<32x1xf32>
    %78 = vector.broadcast %77 : vector<32x1xf32> to vector<32x128xf32>
    %79 = arith.mulf %74, %78 : vector<32x128xf32>
    %80 = vector.broadcast %0 : vector<1x128xf32> to vector<32x128xf32>
    %81 = arith.mulf %79, %80 : vector<32x128xf32>
    %82 = vector.broadcast %1 : vector<1x128xf32> to vector<32x128xf32>
    %83 = arith.addf %81, %82 : vector<32x128xf32>
    %cst_26 = arith.constant dense<0.000000e+00> : vector<32xf32>
    %84 = vector.multi_reduction <add>, %11, %cst_26 [1] : vector<32x128xf32> to vector<32xf32>
    %85 = vector.shape_cast %84 : vector<32xf32> to vector<32x1xf32>
    %cst_27 = arith.constant 1.280000e+02 : f32
    %86 = vector.broadcast %cst_27 : f32 to vector<32x1xf32>
    %87 = arith.divf %85, %86 : vector<32x1xf32>
    %88 = vector.broadcast %87 : vector<32x1xf32> to vector<32x128xf32>
    %89 = arith.subf %11, %88 : vector<32x128xf32>
    %90 = vector.broadcast %87 : vector<32x1xf32> to vector<32x128xf32>
    %91 = arith.subf %11, %90 : vector<32x128xf32>
    %92 = arith.mulf %89, %91 : vector<32x128xf32>
    %cst_28 = arith.constant dense<0.000000e+00> : vector<32xf32>
    %93 = vector.multi_reduction <add>, %92, %cst_28 [1] : vector<32x128xf32> to vector<32xf32>
    %94 = vector.shape_cast %93 : vector<32xf32> to vector<32x1xf32>
    %cst_29 = arith.constant 1.280000e+02 : f32
    %95 = vector.broadcast %cst_29 : f32 to vector<32x1xf32>
    %96 = arith.divf %94, %95 : vector<32x1xf32>
    %97 = vector.broadcast %87 : vector<32x1xf32> to vector<32x128xf32>
    %98 = arith.subf %11, %97 : vector<32x128xf32>
    %cst_30 = arith.constant 9.99999974E-6 : f32
    %99 = vector.broadcast %cst_30 : f32 to vector<32x1xf32>
    %100 = arith.addf %96, %99 : vector<32x1xf32>
    %101 = math.rsqrt %100 : vector<32x1xf32>
    %102 = vector.broadcast %101 : vector<32x1xf32> to vector<32x128xf32>
    %103 = arith.mulf %98, %102 : vector<32x128xf32>
    %104 = vector.broadcast %0 : vector<1x128xf32> to vector<32x128xf32>
    %105 = arith.mulf %103, %104 : vector<32x128xf32>
    %106 = vector.broadcast %1 : vector<1x128xf32> to vector<32x128xf32>
    %107 = arith.addf %105, %106 : vector<32x128xf32>
    %c0_31 = arith.constant 0 : index
    %c0_32 = arith.constant 0 : index
    %108 = memref.load %arg6[%c0_31, %c0_32] : memref<4x4xf32, #tpu.memory_space<smem>>
    %109 = vector.broadcast %108 : f32 to vector<32x128xf32>
    %110 = arith.mulf %35, %109 : vector<32x128xf32>
    %c0_33 = arith.constant 0 : index
    %c1 = arith.constant 1 : index
    %111 = memref.load %arg6[%c0_33, %c1] : memref<4x4xf32, #tpu.memory_space<smem>>
    %112 = vector.broadcast %111 : f32 to vector<32x128xf32>
    %113 = arith.mulf %59, %112 : vector<32x128xf32>
    %114 = arith.addf %110, %113 : vector<32x128xf32>
    %c0_34 = arith.constant 0 : index
    %c2 = arith.constant 2 : index
    %115 = memref.load %arg6[%c0_34, %c2] : memref<4x4xf32, #tpu.memory_space<smem>>
    %116 = vector.broadcast %115 : f32 to vector<32x128xf32>
    %117 = arith.mulf %83, %116 : vector<32x128xf32>
    %118 = arith.addf %114, %117 : vector<32x128xf32>
    %c0_35 = arith.constant 0 : index
    %c3 = arith.constant 3 : index
    %119 = memref.load %arg6[%c0_35, %c3] : memref<4x4xf32, #tpu.memory_space<smem>>
    %120 = vector.broadcast %119 : f32 to vector<32x128xf32>
    %121 = arith.mulf %107, %120 : vector<32x128xf32>
    %122 = arith.addf %118, %121 : vector<32x128xf32>
    %c0_36 = arith.constant 0 : index
    %123 = memref.load %arg7[%c0_36] : memref<4xf32, #tpu.memory_space<smem>>
    %124 = vector.broadcast %123 : f32 to vector<32x128xf32>
    %125 = arith.addf %122, %124 : vector<32x128xf32>
    %cst_37 = arith.constant 5.000000e-01 : f32
    %126 = vector.broadcast %cst_37 : f32 to vector<32x128xf32>
    %127 = arith.mulf %126, %125 : vector<32x128xf32>
    %cst_38 = arith.constant 4.471500e-02 : f32
    %128 = vector.broadcast %cst_38 : f32 to vector<32x128xf32>
    %129 = arith.mulf %128, %125 : vector<32x128xf32>
    %130 = arith.mulf %129, %125 : vector<32x128xf32>
    %131 = arith.mulf %130, %125 : vector<32x128xf32>
    %132 = arith.addf %125, %131 : vector<32x128xf32>
    %cst_39 = arith.constant 0.797884583 : f32
    %133 = vector.broadcast %cst_39 : f32 to vector<32x128xf32>
    %134 = arith.mulf %133, %132 : vector<32x128xf32>
    %135 = math.tanh %134 : vector<32x128xf32>
    %cst_40 = arith.constant 1.000000e+00 : f32
    %136 = vector.broadcast %cst_40 : f32 to vector<32x128xf32>
    %137 = arith.addf %136, %135 : vector<32x128xf32>
    %138 = arith.mulf %127, %137 : vector<32x128xf32>
    %c1_41 = arith.constant 1 : index
    %c0_42 = arith.constant 0 : index
    %139 = memref.load %arg6[%c1_41, %c0_42] : memref<4x4xf32, #tpu.memory_space<smem>>
    %140 = vector.broadcast %139 : f32 to vector<32x128xf32>
    %141 = arith.mulf %35, %140 : vector<32x128xf32>
    %c1_43 = arith.constant 1 : index
    %c1_44 = arith.constant 1 : index
    %142 = memref.load %arg6[%c1_43, %c1_44] : memref<4x4xf32, #tpu.memory_space<smem>>
    %143 = vector.broadcast %142 : f32 to vector<32x128xf32>
    %144 = arith.mulf %59, %143 : vector<32x128xf32>
    %145 = arith.addf %141, %144 : vector<32x128xf32>
    %c1_45 = arith.constant 1 : index
    %c2_46 = arith.constant 2 : index
    %146 = memref.load %arg6[%c1_45, %c2_46] : memref<4x4xf32, #tpu.memory_space<smem>>
    %147 = vector.broadcast %146 : f32 to vector<32x128xf32>
    %148 = arith.mulf %83, %147 : vector<32x128xf32>
    %149 = arith.addf %145, %148 : vector<32x128xf32>
    %c1_47 = arith.constant 1 : index
    %c3_48 = arith.constant 3 : index
    %150 = memref.load %arg6[%c1_47, %c3_48] : memref<4x4xf32, #tpu.memory_space<smem>>
    %151 = vector.broadcast %150 : f32 to vector<32x128xf32>
    %152 = arith.mulf %107, %151 : vector<32x128xf32>
    %153 = arith.addf %149, %152 : vector<32x128xf32>
    %c1_49 = arith.constant 1 : index
    %154 = memref.load %arg7[%c1_49] : memref<4xf32, #tpu.memory_space<smem>>
    %155 = vector.broadcast %154 : f32 to vector<32x128xf32>
    %156 = arith.addf %153, %155 : vector<32x128xf32>
    %cst_50 = arith.constant 5.000000e-01 : f32
    %157 = vector.broadcast %cst_50 : f32 to vector<32x128xf32>
    %158 = arith.mulf %157, %156 : vector<32x128xf32>
    %cst_51 = arith.constant 4.471500e-02 : f32
    %159 = vector.broadcast %cst_51 : f32 to vector<32x128xf32>
    %160 = arith.mulf %159, %156 : vector<32x128xf32>
    %161 = arith.mulf %160, %156 : vector<32x128xf32>
    %162 = arith.mulf %161, %156 : vector<32x128xf32>
    %163 = arith.addf %156, %162 : vector<32x128xf32>
    %cst_52 = arith.constant 0.797884583 : f32
    %164 = vector.broadcast %cst_52 : f32 to vector<32x128xf32>
    %165 = arith.mulf %164, %163 : vector<32x128xf32>
    %166 = math.tanh %165 : vector<32x128xf32>
    %cst_53 = arith.constant 1.000000e+00 : f32
    %167 = vector.broadcast %cst_53 : f32 to vector<32x128xf32>
    %168 = arith.addf %167, %166 : vector<32x128xf32>
    %169 = arith.mulf %158, %168 : vector<32x128xf32>
    %c2_54 = arith.constant 2 : index
    %c0_55 = arith.constant 0 : index
    %170 = memref.load %arg6[%c2_54, %c0_55] : memref<4x4xf32, #tpu.memory_space<smem>>
    %171 = vector.broadcast %170 : f32 to vector<32x128xf32>
    %172 = arith.mulf %35, %171 : vector<32x128xf32>
    %c2_56 = arith.constant 2 : index
    %c1_57 = arith.constant 1 : index
    %173 = memref.load %arg6[%c2_56, %c1_57] : memref<4x4xf32, #tpu.memory_space<smem>>
    %174 = vector.broadcast %173 : f32 to vector<32x128xf32>
    %175 = arith.mulf %59, %174 : vector<32x128xf32>
    %176 = arith.addf %172, %175 : vector<32x128xf32>
    %c2_58 = arith.constant 2 : index
    %c2_59 = arith.constant 2 : index
    %177 = memref.load %arg6[%c2_58, %c2_59] : memref<4x4xf32, #tpu.memory_space<smem>>
    %178 = vector.broadcast %177 : f32 to vector<32x128xf32>
    %179 = arith.mulf %83, %178 : vector<32x128xf32>
    %180 = arith.addf %176, %179 : vector<32x128xf32>
    %c2_60 = arith.constant 2 : index
    %c3_61 = arith.constant 3 : index
    %181 = memref.load %arg6[%c2_60, %c3_61] : memref<4x4xf32, #tpu.memory_space<smem>>
    %182 = vector.broadcast %181 : f32 to vector<32x128xf32>
    %183 = arith.mulf %107, %182 : vector<32x128xf32>
    %184 = arith.addf %180, %183 : vector<32x128xf32>
    %c2_62 = arith.constant 2 : index
    %185 = memref.load %arg7[%c2_62] : memref<4xf32, #tpu.memory_space<smem>>
    %186 = vector.broadcast %185 : f32 to vector<32x128xf32>
    %187 = arith.addf %184, %186 : vector<32x128xf32>
    %cst_63 = arith.constant 5.000000e-01 : f32
    %188 = vector.broadcast %cst_63 : f32 to vector<32x128xf32>
    %189 = arith.mulf %188, %187 : vector<32x128xf32>
    %cst_64 = arith.constant 4.471500e-02 : f32
    %190 = vector.broadcast %cst_64 : f32 to vector<32x128xf32>
    %191 = arith.mulf %190, %187 : vector<32x128xf32>
    %192 = arith.mulf %191, %187 : vector<32x128xf32>
    %193 = arith.mulf %192, %187 : vector<32x128xf32>
    %194 = arith.addf %187, %193 : vector<32x128xf32>
    %cst_65 = arith.constant 0.797884583 : f32
    %195 = vector.broadcast %cst_65 : f32 to vector<32x128xf32>
    %196 = arith.mulf %195, %194 : vector<32x128xf32>
    %197 = math.tanh %196 : vector<32x128xf32>
    %cst_66 = arith.constant 1.000000e+00 : f32
    %198 = vector.broadcast %cst_66 : f32 to vector<32x128xf32>
    %199 = arith.addf %198, %197 : vector<32x128xf32>
    %200 = arith.mulf %189, %199 : vector<32x128xf32>
    %c3_67 = arith.constant 3 : index
    %c0_68 = arith.constant 0 : index
    %201 = memref.load %arg6[%c3_67, %c0_68] : memref<4x4xf32, #tpu.memory_space<smem>>
    %202 = vector.broadcast %201 : f32 to vector<32x128xf32>
    %203 = arith.mulf %35, %202 : vector<32x128xf32>
    %c3_69 = arith.constant 3 : index
    %c1_70 = arith.constant 1 : index
    %204 = memref.load %arg6[%c3_69, %c1_70] : memref<4x4xf32, #tpu.memory_space<smem>>
    %205 = vector.broadcast %204 : f32 to vector<32x128xf32>
    %206 = arith.mulf %59, %205 : vector<32x128xf32>
    %207 = arith.addf %203, %206 : vector<32x128xf32>
    %c3_71 = arith.constant 3 : index
    %c2_72 = arith.constant 2 : index
    %208 = memref.load %arg6[%c3_71, %c2_72] : memref<4x4xf32, #tpu.memory_space<smem>>
    %209 = vector.broadcast %208 : f32 to vector<32x128xf32>
    %210 = arith.mulf %83, %209 : vector<32x128xf32>
    %211 = arith.addf %207, %210 : vector<32x128xf32>
    %c3_73 = arith.constant 3 : index
    %c3_74 = arith.constant 3 : index
    %212 = memref.load %arg6[%c3_73, %c3_74] : memref<4x4xf32, #tpu.memory_space<smem>>
    %213 = vector.broadcast %212 : f32 to vector<32x128xf32>
    %214 = arith.mulf %107, %213 : vector<32x128xf32>
    %215 = arith.addf %211, %214 : vector<32x128xf32>
    %c3_75 = arith.constant 3 : index
    %216 = memref.load %arg7[%c3_75] : memref<4xf32, #tpu.memory_space<smem>>
    %217 = vector.broadcast %216 : f32 to vector<32x128xf32>
    %218 = arith.addf %215, %217 : vector<32x128xf32>
    %cst_76 = arith.constant 5.000000e-01 : f32
    %219 = vector.broadcast %cst_76 : f32 to vector<32x128xf32>
    %220 = arith.mulf %219, %218 : vector<32x128xf32>
    %cst_77 = arith.constant 4.471500e-02 : f32
    %221 = vector.broadcast %cst_77 : f32 to vector<32x128xf32>
    %222 = arith.mulf %221, %218 : vector<32x128xf32>
    %223 = arith.mulf %222, %218 : vector<32x128xf32>
    %224 = arith.mulf %223, %218 : vector<32x128xf32>
    %225 = arith.addf %218, %224 : vector<32x128xf32>
    %cst_78 = arith.constant 0.797884583 : f32
    %226 = vector.broadcast %cst_78 : f32 to vector<32x128xf32>
    %227 = arith.mulf %226, %225 : vector<32x128xf32>
    %228 = math.tanh %227 : vector<32x128xf32>
    %cst_79 = arith.constant 1.000000e+00 : f32
    %229 = vector.broadcast %cst_79 : f32 to vector<32x128xf32>
    %230 = arith.addf %229, %228 : vector<32x128xf32>
    %231 = arith.mulf %220, %230 : vector<32x128xf32>
    %c0_80 = arith.constant 0 : index
    %c0_81 = arith.constant 0 : index
    %232 = memref.load %arg8[%c0_80, %c0_81] : memref<4x4xf32, #tpu.memory_space<smem>>
    %233 = vector.broadcast %232 : f32 to vector<32x128xf32>
    %234 = arith.mulf %138, %233 : vector<32x128xf32>
    %c0_82 = arith.constant 0 : index
    %c1_83 = arith.constant 1 : index
    %235 = memref.load %arg8[%c0_82, %c1_83] : memref<4x4xf32, #tpu.memory_space<smem>>
    %236 = vector.broadcast %235 : f32 to vector<32x128xf32>
    %237 = arith.mulf %169, %236 : vector<32x128xf32>
    %238 = arith.addf %234, %237 : vector<32x128xf32>
    %c0_84 = arith.constant 0 : index
    %c2_85 = arith.constant 2 : index
    %239 = memref.load %arg8[%c0_84, %c2_85] : memref<4x4xf32, #tpu.memory_space<smem>>
    %240 = vector.broadcast %239 : f32 to vector<32x128xf32>
    %241 = arith.mulf %200, %240 : vector<32x128xf32>
    %242 = arith.addf %238, %241 : vector<32x128xf32>
    %c0_86 = arith.constant 0 : index
    %c3_87 = arith.constant 3 : index
    %243 = memref.load %arg8[%c0_86, %c3_87] : memref<4x4xf32, #tpu.memory_space<smem>>
    %244 = vector.broadcast %243 : f32 to vector<32x128xf32>
    %245 = arith.mulf %231, %244 : vector<32x128xf32>
    %246 = arith.addf %242, %245 : vector<32x128xf32>
    %247 = arith.addf %5, %246 : vector<32x128xf32>
    %c0_88 = arith.constant 0 : index
    %248 = memref.load %arg9[%c0_88] : memref<4xf32, #tpu.memory_space<smem>>
    %249 = vector.broadcast %248 : f32 to vector<32x128xf32>
    %250 = arith.addf %247, %249 : vector<32x128xf32>
    %c1_89 = arith.constant 1 : index
    %c0_90 = arith.constant 0 : index
    %251 = memref.load %arg8[%c1_89, %c0_90] : memref<4x4xf32, #tpu.memory_space<smem>>
    %252 = vector.broadcast %251 : f32 to vector<32x128xf32>
    %253 = arith.mulf %138, %252 : vector<32x128xf32>
    %c1_91 = arith.constant 1 : index
    %c1_92 = arith.constant 1 : index
    %254 = memref.load %arg8[%c1_91, %c1_92] : memref<4x4xf32, #tpu.memory_space<smem>>
    %255 = vector.broadcast %254 : f32 to vector<32x128xf32>
    %256 = arith.mulf %169, %255 : vector<32x128xf32>
    %257 = arith.addf %253, %256 : vector<32x128xf32>
    %c1_93 = arith.constant 1 : index
    %c2_94 = arith.constant 2 : index
    %258 = memref.load %arg8[%c1_93, %c2_94] : memref<4x4xf32, #tpu.memory_space<smem>>
    %259 = vector.broadcast %258 : f32 to vector<32x128xf32>
    %260 = arith.mulf %200, %259 : vector<32x128xf32>
    %261 = arith.addf %257, %260 : vector<32x128xf32>
    %c1_95 = arith.constant 1 : index
    %c3_96 = arith.constant 3 : index
    %262 = memref.load %arg8[%c1_95, %c3_96] : memref<4x4xf32, #tpu.memory_space<smem>>
    %263 = vector.broadcast %262 : f32 to vector<32x128xf32>
    %264 = arith.mulf %231, %263 : vector<32x128xf32>
    %265 = arith.addf %261, %264 : vector<32x128xf32>
    %266 = arith.addf %7, %265 : vector<32x128xf32>
    %c1_97 = arith.constant 1 : index
    %267 = memref.load %arg9[%c1_97] : memref<4xf32, #tpu.memory_space<smem>>
    %268 = vector.broadcast %267 : f32 to vector<32x128xf32>
    %269 = arith.addf %266, %268 : vector<32x128xf32>
    %c2_98 = arith.constant 2 : index
    %c0_99 = arith.constant 0 : index
    %270 = memref.load %arg8[%c2_98, %c0_99] : memref<4x4xf32, #tpu.memory_space<smem>>
    %271 = vector.broadcast %270 : f32 to vector<32x128xf32>
    %272 = arith.mulf %138, %271 : vector<32x128xf32>
    %c2_100 = arith.constant 2 : index
    %c1_101 = arith.constant 1 : index
    %273 = memref.load %arg8[%c2_100, %c1_101] : memref<4x4xf32, #tpu.memory_space<smem>>
    %274 = vector.broadcast %273 : f32 to vector<32x128xf32>
    %275 = arith.mulf %169, %274 : vector<32x128xf32>
    %276 = arith.addf %272, %275 : vector<32x128xf32>
    %c2_102 = arith.constant 2 : index
    %c2_103 = arith.constant 2 : index
    %277 = memref.load %arg8[%c2_102, %c2_103] : memref<4x4xf32, #tpu.memory_space<smem>>
    %278 = vector.broadcast %277 : f32 to vector<32x128xf32>
    %279 = arith.mulf %200, %278 : vector<32x128xf32>
    %280 = arith.addf %276, %279 : vector<32x128xf32>
    %c2_104 = arith.constant 2 : index
    %c3_105 = arith.constant 3 : index
    %281 = memref.load %arg8[%c2_104, %c3_105] : memref<4x4xf32, #tpu.memory_space<smem>>
    %282 = vector.broadcast %281 : f32 to vector<32x128xf32>
    %283 = arith.mulf %231, %282 : vector<32x128xf32>
    %284 = arith.addf %280, %283 : vector<32x128xf32>
    %285 = arith.addf %9, %284 : vector<32x128xf32>
    %c2_106 = arith.constant 2 : index
    %286 = memref.load %arg9[%c2_106] : memref<4xf32, #tpu.memory_space<smem>>
    %287 = vector.broadcast %286 : f32 to vector<32x128xf32>
    %288 = arith.addf %285, %287 : vector<32x128xf32>
    %c3_107 = arith.constant 3 : index
    %c0_108 = arith.constant 0 : index
    %289 = memref.load %arg8[%c3_107, %c0_108] : memref<4x4xf32, #tpu.memory_space<smem>>
    %290 = vector.broadcast %289 : f32 to vector<32x128xf32>
    %291 = arith.mulf %138, %290 : vector<32x128xf32>
    %c3_109 = arith.constant 3 : index
    %c1_110 = arith.constant 1 : index
    %292 = memref.load %arg8[%c3_109, %c1_110] : memref<4x4xf32, #tpu.memory_space<smem>>
    %293 = vector.broadcast %292 : f32 to vector<32x128xf32>
    %294 = arith.mulf %169, %293 : vector<32x128xf32>
    %295 = arith.addf %291, %294 : vector<32x128xf32>
    %c3_111 = arith.constant 3 : index
    %c2_112 = arith.constant 2 : index
    %296 = memref.load %arg8[%c3_111, %c2_112] : memref<4x4xf32, #tpu.memory_space<smem>>
    %297 = vector.broadcast %296 : f32 to vector<32x128xf32>
    %298 = arith.mulf %200, %297 : vector<32x128xf32>
    %299 = arith.addf %295, %298 : vector<32x128xf32>
    %c3_113 = arith.constant 3 : index
    %c3_114 = arith.constant 3 : index
    %300 = memref.load %arg8[%c3_113, %c3_114] : memref<4x4xf32, #tpu.memory_space<smem>>
    %301 = vector.broadcast %300 : f32 to vector<32x128xf32>
    %302 = arith.mulf %231, %301 : vector<32x128xf32>
    %303 = arith.addf %299, %302 : vector<32x128xf32>
    %304 = arith.addf %11, %303 : vector<32x128xf32>
    %c3_115 = arith.constant 3 : index
    %305 = memref.load %arg9[%c3_115] : memref<4xf32, #tpu.memory_space<smem>>
    %306 = vector.broadcast %305 : f32 to vector<32x128xf32>
    %307 = arith.addf %304, %306 : vector<32x128xf32>
    %308 = tpu.concatenate %250, %269, %288, %307 in 0 : vector<32x128xf32>, vector<32x128xf32>, vector<32x128xf32>, vector<32x128xf32> -> vector<128x128xf32>
    %cst_116 = arith.constant dense<0.000000e+00> : vector<128xf32>
    %309 = vector.multi_reduction <add>, %308, %cst_116 [1] : vector<128x128xf32> to vector<128xf32>
    %310 = vector.shape_cast %309 : vector<128xf32> to vector<128x1xf32>
    %cst_117 = arith.constant 1.280000e+02 : f32
    %311 = vector.broadcast %cst_117 : f32 to vector<128x1xf32>
    %312 = arith.divf %310, %311 : vector<128x1xf32>
    %313 = vector.broadcast %312 : vector<128x1xf32> to vector<128x128xf32>
    %314 = arith.subf %308, %313 : vector<128x128xf32>
    %315 = vector.broadcast %312 : vector<128x1xf32> to vector<128x128xf32>
    %316 = arith.subf %308, %315 : vector<128x128xf32>
    %317 = arith.mulf %314, %316 : vector<128x128xf32>
    %cst_118 = arith.constant dense<0.000000e+00> : vector<128xf32>
    %318 = vector.multi_reduction <add>, %317, %cst_118 [1] : vector<128x128xf32> to vector<128xf32>
    %319 = vector.shape_cast %318 : vector<128xf32> to vector<128x1xf32>
    %cst_119 = arith.constant 1.280000e+02 : f32
    %320 = vector.broadcast %cst_119 : f32 to vector<128x1xf32>
    %321 = arith.divf %319, %320 : vector<128x1xf32>
    %322 = vector.broadcast %312 : vector<128x1xf32> to vector<128x128xf32>
    %323 = arith.subf %308, %322 : vector<128x128xf32>
    %cst_120 = arith.constant 9.99999974E-6 : f32
    %324 = vector.broadcast %cst_120 : f32 to vector<128x1xf32>
    %325 = arith.addf %321, %324 : vector<128x1xf32>
    %326 = math.rsqrt %325 : vector<128x1xf32>
    %327 = vector.broadcast %326 : vector<128x1xf32> to vector<128x128xf32>
    %328 = arith.mulf %323, %327 : vector<128x128xf32>
    %329 = vector.broadcast %2 : vector<1x128xf32> to vector<128x128xf32>
    %330 = arith.mulf %328, %329 : vector<128x128xf32>
    %331 = vector.broadcast %3 : vector<1x128xf32> to vector<128x128xf32>
    %332 = arith.addf %330, %331 : vector<128x128xf32>
    %333 = arith.truncf %332 : vector<128x128xf32> to vector<128x128xbf16>
    %c0_121 = arith.constant 0 : index
    %c0_122 = arith.constant 0 : index
    %334 = vector.load %arg10[%c0_121, %c0_122] : memref<128x128xbf16, #tpu.memory_space<vmem>>, vector<128x128xbf16>
    %cst_123 = arith.constant dense<0.000000e+00> : vector<128x128xf32>
    %335 = tpu.matmul %333, %334, %cst_123 {dimension_numbers = #tpu.dot_dimension_numbers<[1], [0], [0], [1], [0, 0, 1, 1], [], []>} : vector<128x128xbf16>, vector<128x128xbf16>, vector<128x128xf32> -> vector<128x128xf32>
    %c0_124 = arith.constant 0 : index
    %c0_125 = arith.constant 0 : index
    %336 = vector.load %arg11[%c0_124, %c0_125] : memref<1x128xf32, #tpu.memory_space<vmem>>, vector<1x128xf32>
    %337 = vector.broadcast %336 : vector<1x128xf32> to vector<128x128xf32>
    %338 = arith.addf %335, %337 : vector<128x128xf32>
    %cst_126 = arith.constant 5.000000e-01 : f32
    %339 = vector.broadcast %cst_126 : f32 to vector<128x128xf32>
    %340 = arith.mulf %339, %338 : vector<128x128xf32>
    %cst_127 = arith.constant 4.471500e-02 : f32
    %341 = vector.broadcast %cst_127 : f32 to vector<128x128xf32>
    %342 = arith.mulf %341, %338 : vector<128x128xf32>
    %343 = arith.mulf %342, %338 : vector<128x128xf32>
    %344 = arith.mulf %343, %338 : vector<128x128xf32>
    %345 = arith.addf %338, %344 : vector<128x128xf32>
    %cst_128 = arith.constant 0.797884583 : f32
    %346 = vector.broadcast %cst_128 : f32 to vector<128x128xf32>
    %347 = arith.mulf %346, %345 : vector<128x128xf32>
    %348 = math.tanh %347 : vector<128x128xf32>
    %cst_129 = arith.constant 1.000000e+00 : f32
    %349 = vector.broadcast %cst_129 : f32 to vector<128x128xf32>
    %350 = arith.addf %349, %348 : vector<128x128xf32>
    %351 = arith.mulf %340, %350 : vector<128x128xf32>
    %352 = arith.truncf %351 : vector<128x128xf32> to vector<128x128xbf16>
    %c0_130 = arith.constant 0 : index
    %c0_131 = arith.constant 0 : index
    %353 = vector.load %arg12[%c0_130, %c0_131] : memref<128x128xbf16, #tpu.memory_space<vmem>>, vector<128x128xbf16>
    %cst_132 = arith.constant dense<0.000000e+00> : vector<128x128xf32>
    %354 = tpu.matmul %352, %353, %cst_132 {dimension_numbers = #tpu.dot_dimension_numbers<[1], [0], [0], [1], [0, 0, 1, 1], [], []>} : vector<128x128xbf16>, vector<128x128xbf16>, vector<128x128xf32> -> vector<128x128xf32>
    %c0_133 = arith.constant 0 : index
    %c0_134 = arith.constant 0 : index
    %355 = vector.load %arg13[%c0_133, %c0_134] : memref<1x128xf32, #tpu.memory_space<vmem>>, vector<1x128xf32>
    %356 = vector.broadcast %355 : vector<1x128xf32> to vector<128x128xf32>
    %357 = arith.addf %354, %356 : vector<128x128xf32>
    %358 = arith.addf %308, %357 : vector<128x128xf32>
    %359 = vector.extract_strided_slice %358 {offsets = [0, 0], sizes = [32, 128], strides = [1, 1]} : vector<128x128xf32> to vector<32x128xf32>
    %360 = arith.truncf %359 : vector<32x128xf32> to vector<32x128xbf16>
    %c0_135 = arith.constant 0 : index
    %c0_136 = arith.constant 0 : index
    %361 = vector.load %arg14[%c0_135, %c0_136] : memref<32x512xbf16, #tpu.memory_space<vmem>>, vector<32x128xbf16>
    tpu.vector_store %arg14[%c0_135, %c0_136], %360 {strides = array<i32>} : memref<32x512xbf16, #tpu.memory_space<vmem>>, vector<32x128xbf16>,
    %362 = vector.extract_strided_slice %358 {offsets = [32, 0], sizes = [32, 128], strides = [1, 1]} : vector<128x128xf32> to vector<32x128xf32>
    %363 = arith.truncf %362 : vector<32x128xf32> to vector<32x128xbf16>
    %c0_137 = arith.constant 0 : index
    %c128_138 = arith.constant 128 : index
    %364 = vector.load %arg14[%c0_137, %c128_138] : memref<32x512xbf16, #tpu.memory_space<vmem>>, vector<32x128xbf16>
    tpu.vector_store %arg14[%c0_137, %c128_138], %363 {strides = array<i32>} : memref<32x512xbf16, #tpu.memory_space<vmem>>, vector<32x128xbf16>,
    %365 = vector.extract_strided_slice %358 {offsets = [64, 0], sizes = [32, 128], strides = [1, 1]} : vector<128x128xf32> to vector<32x128xf32>
    %366 = arith.truncf %365 : vector<32x128xf32> to vector<32x128xbf16>
    %c0_139 = arith.constant 0 : index
    %c256_140 = arith.constant 256 : index
    %367 = vector.load %arg14[%c0_139, %c256_140] : memref<32x512xbf16, #tpu.memory_space<vmem>>, vector<32x128xbf16>
    tpu.vector_store %arg14[%c0_139, %c256_140], %366 {strides = array<i32>} : memref<32x512xbf16, #tpu.memory_space<vmem>>, vector<32x128xbf16>,
    %368 = vector.extract_strided_slice %358 {offsets = [96, 0], sizes = [32, 128], strides = [1, 1]} : vector<128x128xf32> to vector<32x128xf32>
    %369 = arith.truncf %368 : vector<32x128xf32> to vector<32x128xbf16>
    %c0_141 = arith.constant 0 : index
    %c384_142 = arith.constant 384 : index
    %370 = vector.load %arg14[%c0_141, %c384_142] : memref<32x512xbf16, #tpu.memory_space<vmem>>, vector<32x128xbf16>
    tpu.vector_store %arg14[%c0_141, %c384_142], %369 {strides = array<i32>} : memref<32x512xbf16, #tpu.memory_space<vmem>>, vector<32x128xbf16>,
    return
  }
  func.func @transform_0(%arg0: i32) -> (i32, i32) {
    %c0_i32 = arith.constant 0 : i32
    %c0_i32_0 = arith.constant 0 : i32
    return %arg0, %c0_i32 : i32, i32
  }
  func.func @transform_1(%arg0: i32) -> (i32, i32) {
    %c0_i32 = arith.constant 0 : i32
    %c0_i32_0 = arith.constant 0 : i32
    %c0_i32_1 = arith.constant 0 : i32
    return %c0_i32, %c0_i32_0 : i32, i32
  }
  func.func @transform_2(%arg0: i32) -> (i32, i32) {
    %c0_i32 = arith.constant 0 : i32
    %c0_i32_0 = arith.constant 0 : i32
    %c0_i32_1 = arith.constant 0 : i32
    return %c0_i32, %c0_i32_0 : i32, i32
  }
  func.func @transform_3(%arg0: i32) -> (i32, i32) {
    %c0_i32 = arith.constant 0 : i32
    %c0_i32_0 = arith.constant 0 : i32
    %c0_i32_1 = arith.constant 0 : i32
    return %c0_i32, %c0_i32_0 : i32, i32
  }
  func.func @transform_4(%arg0: i32) -> (i32, i32) {
    %c0_i32 = arith.constant 0 : i32
    %c0_i32_0 = arith.constant 0 : i32
    %c0_i32_1 = arith.constant 0 : i32
    return %c0_i32, %c0_i32_0 : i32, i32
  }
  func.func @transform_5(%arg0: i32) -> (i32, i32) {
    %c0_i32 = arith.constant 0 : i32
    %c0_i32_0 = arith.constant 0 : i32
    %c0_i32_1 = arith.constant 0 : i32
    return %c0_i32, %c0_i32_0 : i32, i32
  }
  func.func @transform_6(%arg0: i32) -> i32 {
    %c0_i32 = arith.constant 0 : i32
    %c0_i32_0 = arith.constant 0 : i32
    return %c0_i32 : i32
  }
  func.func @transform_7(%arg0: i32) -> (i32, i32) {
    %c0_i32 = arith.constant 0 : i32
    %c0_i32_0 = arith.constant 0 : i32
    %c0_i32_1 = arith.constant 0 : i32
    return %c0_i32, %c0_i32_0 : i32, i32
  }
  func.func @transform_8(%arg0: i32) -> i32 {
    %c0_i32 = arith.constant 0 : i32
    %c0_i32_0 = arith.constant 0 : i32
    return %c0_i32 : i32
  }
  func.func @transform_9(%arg0: i32) -> (i32, i32) {
    %c0_i32 = arith.constant 0 : i32
    %c0_i32_0 = arith.constant 0 : i32
    %c0_i32_1 = arith.constant 0 : i32
    return %c0_i32, %c0_i32_0 : i32, i32
  }
  func.func @transform_10(%arg0: i32) -> (i32, i32) {
    %c0_i32 = arith.constant 0 : i32
    %c0_i32_0 = arith.constant 0 : i32
    %c0_i32_1 = arith.constant 0 : i32
    return %c0_i32, %c0_i32_0 : i32, i32
  }
  func.func @transform_11(%arg0: i32) -> (i32, i32) {
    %c0_i32 = arith.constant 0 : i32
    %c0_i32_0 = arith.constant 0 : i32
    %c0_i32_1 = arith.constant 0 : i32
    return %c0_i32, %c0_i32_0 : i32, i32
  }
  func.func @transform_12(%arg0: i32) -> (i32, i32) {
    %c0_i32 = arith.constant 0 : i32
    %c0_i32_0 = arith.constant 0 : i32
    %c0_i32_1 = arith.constant 0 : i32
    return %c0_i32, %c0_i32_0 : i32, i32
  }
  func.func @transform_13(%arg0: i32) -> (i32, i32) {
    %c0_i32 = arith.constant 0 : i32
    %c0_i32_0 = arith.constant 0 : i32
    return %arg0, %c0_i32 : i32, i32
  }
}

</mosaic_0001>

<llo_original>
// kernel: tpu_custom_call.1
$region0: #{tpu_custom_call.1}
  #allocation0 [shape = 'u32[]', space=smem, size = 0x4, offset = 0x4, fixed_abs, tag = 'smem constant byte address 0x4 - core index']
  #allocation1 [shape = 'u32[144,128]{1,0:T(1,128)}', space=vmem, size = 0x12000, scoped, tag = 'internal scratch']
  %s0 = inlined_call_operand.hbm [shape: bf16[256,512], index: 0, kind: input, shape index: {}]
  %s1 = inlined_call_operand.vmem [shape: f32[1,128], index: 1, kind: input, shape index: {}]
  %s2 = inlined_call_operand.vmem [shape: f32[1,128], index: 2, kind: input, shape index: {}]
  %s3 = inlined_call_operand.vmem [shape: f32[1,128], index: 3, kind: input, shape index: {}]
  %s4 = inlined_call_operand.vmem [shape: f32[1,128], index: 4, kind: input, shape index: {}]
  %s5 = inlined_call_operand.vmem [shape: f32[4,4], index: 5, kind: input, shape index: {}]
  %s6 = inlined_call_operand.vmem [shape: f32[4], index: 6, kind: input, shape index: {}]
  %s7 = inlined_call_operand.vmem [shape: f32[4,4], index: 7, kind: input, shape index: {}]
  %s8 = inlined_call_operand.vmem [shape: f32[4], index: 8, kind: input, shape index: {}]
  %s9 = inlined_call_operand.hbm [shape: bf16[128,128], index: 9, kind: input, shape index: {}]
  %s10 = inlined_call_operand.vmem [shape: f32[1,128], index: 10, kind: input, shape index: {}]
  %s11 = inlined_call_operand.hbm [shape: bf16[128,128], index: 11, kind: input, shape index: {}]
  %s12 = inlined_call_operand.vmem [shape: f32[1,128], index: 12, kind: input, shape index: {}]
  %s13 = inlined_call_operand.hbm [shape: bf16[256,512], index: 13, kind: output, shape index: {}]
  %s14 = sld [smem:[#allocation0]]
  $region113: #{tpu_custom_call.1} parent=0
    _
  %s16 = ssub.s32 1, %s14
  %s17 = scalar_select 0, %s16, %s14
  $region1: #{tpu_custom_call.1} parent=0
    #allocation2 [shape = 'u8[65536]{0}', space=vmem, size = 0x10000, scoped, tag = 'input window, operand 0']
    #allocation3 [shape = 's32[2]{0}', space=sflag, size = 0x8, scoped, tag = 'scoped memory for tpu_custom_call.1']
    #allocation4 [shape = 's32[2]{0}', space=sflag, size = 0x8, scoped, tag = 'scoped memory for tpu_custom_call.1']
    #allocation5 [shape = 's32[2]{0}', space=sflag, size = 0x8, scoped, tag = 'scoped memory for tpu_custom_call.1']
    #allocation6 [shape = 'u8[2048]{0}', space=smem, size = 0x800, scoped, tag = 'input window, operand 5, single buffered']
    #allocation7 [shape = 'u8[512]{0}', space=smem, size = 0x200, scoped, tag = 'input window, operand 6, single buffered']
    #allocation8 [shape = 's32[1]{0}', space=sflag, size = 0x4, scoped, tag = 'scoped memory for tpu_custom_call.1']
    #allocation9 [shape = 'u8[2048]{0}', space=smem, size = 0x800, scoped, tag = 'input window, operand 7, single buffered']
    #allocation10 [shape = 'u8[512]{0}', space=smem, size = 0x200, scoped, tag = 'input window, operand 8, single buffered']
    #allocation11 [shape = 's32[1]{0}', space=sflag, size = 0x4, scoped, tag = 'scoped memory for tpu_custom_call.1']
    #allocation12 [shape = 'u8[32768]{0}', space=vmem, size = 0x8000, scoped, tag = 'input window, operand 9, single buffered']
    #allocation13 [shape = 's32[1]{0}', space=sflag, size = 0x4, scoped, tag = 'scoped memory for tpu_custom_call.1']
    #allocation14 [shape = 'u8[32768]{0}', space=vmem, size = 0x8000, scoped, tag = 'input window, operand 11, single buffered']
    #allocation15 [shape = 'u8[65536]{0}', space=vmem, size = 0x10000, scoped, tag = 'output window, operand 0']
    %18 = vsyncpa [#allocation3], 0
    %s19 = scalar_lea.sflag [#allocation3], 1
    %20 = vsyncpa %s19, 0
    %21 = vsyncpa [#allocation5], 0
    %22 = vsyncpa [#allocation8], 0
    %23 = vsyncpa [#allocation11], 0
    %24 = vsyncpa [#allocation13], 0
    %25 = vsyncpa [#allocation4], 0
    %s26 = scalar_lea.sflag [#allocation4], 1
    %27 = vsyncpa %s26, 0
    loop: start=0, step=1, limit=10
    $region2: #{tpu_custom_call.1} parent=1 // loop_pre_header
      _
    $region3: #{tpu_custom_call.1} parent=1 // loop_header
      %s29 = sphi 0, %s33
      %p30 = scmp.ge.s32.totalorder %s29, 10
      %s39 = sphi 0, %s41
      %s42 = sphi 0, %s39
      %s43 = sphi 0, %s42
      %s59 = sphi 0, %s43
      %s63 = sphi 0, %s63
      %s65 = sphi 0, %s63
      %s66 = sphi 0, %s65
      %s80 = sphi 0, %s66
      %s84 = sphi 0, %s84
      %s86 = sphi 0, %s84
      %s87 = sphi 0, %s86
      %s101 = sphi 0, %s87
      %s105 = sphi 0, %s105
      %s107 = sphi 0, %s105
      %s108 = sphi 0, %s107
      %s122 = sphi 0, %s108
      %s126 = sphi 0, %s126
      %s128 = sphi 0, %s126
      %s129 = sphi 0, %s128
      %s143 = sphi 0, %s129
      %s147 = sphi 0, %s147
      %s149 = sphi 0, %s147
      %s150 = sphi 0, %s149
      %s164 = sphi 0, %s150
      %s168 = sphi 0, %s168
      %s170 = sphi 0, %s168
      %s171 = sphi 0, %s170
      %s185 = sphi 0, %s171
      %s189 = sphi 0, %s189
      %s191 = sphi 0, %s189
      %s192 = sphi 0, %s191
      %s206 = sphi 0, %s192
      %s210 = sphi 0, %s210
      %s212 = sphi 0, %s210
      %s213 = sphi 0, %s212
      %s227 = sphi 0, %s213
      %s231 = sphi 0, %s231
      %s233 = sphi 0, %s231
      %s234 = sphi 0, %s233
      %s248 = sphi 0, %s234
      %s252 = sphi 0, %s252
      %s254 = sphi 0, %s252
      %s255 = sphi 0, %s254
      %s269 = sphi 0, %s255
      %s273 = sphi 0, %s273
      %s275 = sphi 0, %s273
      %s276 = sphi 0, %s275
      %s290 = sphi 0, %s276
      %s294 = sphi 0, %s294
      %s296 = sphi 0, %s294
      %s297 = sphi 0, %s296
      %s311 = sphi 0, %s297
      %s317 = sphi 0, %s319
      %s320 = sphi 0, %s317
      %s321 = sphi 0, %s320
      %s337 = sphi 0, %s321
    $region4: #{tpu_custom_call.1} parent=1 // loop_header_branch
      %32 = sbr.rel (%p30) target = $region8
    $region5: #{tpu_custom_call.1} parent=1 // loop_body
      %s34 = ssub.s32 %s29, 1
      %s35 = ssub.s32 %s29, 2
      %s36 = sadd.s32 %s29, 1
      %s37 = ssub.s32 %s29, %s36
      %p38 = scmp.eq.s32.totalorder %s37, 0
      %s40 = sadd.s32 %s39, 1
      %s41 = scalar_select %p38, %s39, %s40
      %p44 = pneg %p38
      %p45 = scmp.eq.s32.totalorder %s29, 7
      %p46 = por %p44, %p45
      %p47 = scmp.ne.s32.totalorder %s39, %s42
      %p48 = scmp.eq.s32.totalorder %s29, 0
      %p49 = por %p47, %p48
      %p50 = scmp.ne.s32.totalorder %s39, %s42
      %p51 = scmp.eq.s32.totalorder %s34, 7
      %p52 = por %p50, %p51
      %p53 = scmp.ne.s32.totalorder %s42, %s43
      %p54 = scmp.eq.s32.totalorder %s34, 0
      %p55 = por %p53, %p54
      %p56 = scmp.ne.s32.totalorder %s42, %s43
      %p57 = scmp.eq.s32.totalorder %s35, 7
      %p58 = por %p56, %p57
      %p60 = scmp.ne.s32.totalorder %s43, %s59
      %p61 = scmp.eq.s32.totalorder %s35, 0
      %p62 = por %p60, %p61
      %s64 = sadd.s32 %s63, 1
      %p67 = scmp.eq.s32.totalorder %s29, 7
      %p68 = scmp.ne.s32.totalorder %s63, %s65
      %p69 = scmp.eq.s32.totalorder %s29, 0
      %p70 = por %p68, %p69
      %p71 = scmp.ne.s32.totalorder %s63, %s65
      %p72 = scmp.eq.s32.totalorder %s34, 7
      %p73 = por %p71, %p72
      %p74 = scmp.ne.s32.totalorder %s65, %s66
      %p75 = scmp.eq.s32.totalorder %s34, 0
      %p76 = por %p74, %p75
      %p77 = scmp.ne.s32.totalorder %s65, %s66
      %p78 = scmp.eq.s32.totalorder %s35, 7
      %p79 = por %p77, %p78
      %p81 = scmp.ne.s32.totalorder %s66, %s80
      %p82 = scmp.eq.s32.totalorder %s35, 0
      %p83 = por %p81, %p82
      %s85 = sadd.s32 %s84, 1
      %p88 = scmp.eq.s32.totalorder %s29, 7
      %p89 = scmp.ne.s32.totalorder %s84, %s86
      %p90 = scmp.eq.s32.totalorder %s29, 0
      %p91 = por %p89, %p90
      %p92 = scmp.ne.s32.totalorder %s84, %s86
      %p93 = scmp.eq.s32.totalorder %s34, 7
      %p94 = por %p92, %p93
      %p95 = scmp.ne.s32.totalorder %s86, %s87
      %p96 = scmp.eq.s32.totalorder %s34, 0
      %p97 = por %p95, %p96
      %p98 = scmp.ne.s32.totalorder %s86, %s87
      %p99 = scmp.eq.s32.totalorder %s35, 7
      %p100 = por %p98, %p99
      %p102 = scmp.ne.s32.totalorder %s87, %s101
      %p103 = scmp.eq.s32.totalorder %s35, 0
      %p104 = por %p102, %p103
      %s106 = sadd.s32 %s105, 1
      %p109 = scmp.eq.s32.totalorder %s29, 7
      %p110 = scmp.ne.s32.totalorder %s105, %s107
      %p111 = scmp.eq.s32.totalorder %s29, 0
      %p112 = por %p110, %p111
      %p113 = scmp.ne.s32.totalorder %s105, %s107
      %p114 = scmp.eq.s32.totalorder %s34, 7
      %p115 = por %p113, %p114
      %p116 = scmp.ne.s32.totalorder %s107, %s108
      %p117 = scmp.eq.s32.totalorder %s34, 0
      %p118 = por %p116, %p117
      %p119 = scmp.ne.s32.totalorder %s107, %s108
      %p120 = scmp.eq.s32.totalorder %s35, 7
      %p121 = por %p119, %p120
      %p123 = scmp.ne.s32.totalorder %s108, %s122
      %p124 = scmp.eq.s32.totalorder %s35, 0
      %p125 = por %p123, %p124
      %s127 = sadd.s32 %s126, 1
      %p130 = scmp.eq.s32.totalorder %s29, 7
      %p131 = scmp.ne.s32.totalorder %s126, %s128
      %p132 = scmp.eq.s32.totalorder %s29, 0
      %p133 = por %p131, %p132
      %p134 = scmp.ne.s32.totalorder %s126, %s128
      %p135 = scmp.eq.s32.totalorder %s34, 7
      %p136 = por %p134, %p135
      %p137 = scmp.ne.s32.totalorder %s128, %s129
      %p138 = scmp.eq.s32.totalorder %s34, 0
      %p139 = por %p137, %p138
      %p140 = scmp.ne.s32.totalorder %s128, %s129
      %p141 = scmp.eq.s32.totalorder %s35, 7
      %p142 = por %p140, %p141
      %p144 = scmp.ne.s32.totalorder %s129, %s143
      %p145 = scmp.eq.s32.totalorder %s35, 0
      %p146 = por %p144, %p145
      %s148 = sadd.s32 %s147, 1
      %p151 = scmp.eq.s32.totalorder %s29, 7
      %p152 = scmp.ne.s32.totalorder %s147, %s149
      %p153 = scmp.eq.s32.totalorder %s29, 0
      %p154 = por %p152, %p153
      %p155 = scmp.ne.s32.totalorder %s147, %s149
      %p156 = scmp.eq.s32.totalorder %s34, 7
      %p157 = por %p155, %p156
      %p158 = scmp.ne.s32.totalorder %s149, %s150
      %p159 = scmp.eq.s32.totalorder %s34, 0
      %p160 = por %p158, %p159
      %p161 = scmp.ne.s32.totalorder %s149, %s150
      %p162 = scmp.eq.s32.totalorder %s35, 7
      %p163 = por %p161, %p162
      %p165 = scmp.ne.s32.totalorder %s150, %s164
      %p166 = scmp.eq.s32.totalorder %s35, 0
      %p167 = por %p165, %p166
      %s169 = sadd.s32 %s168, 1
      %p172 = scmp.eq.s32.totalorder %s29, 7
      %p173 = scmp.ne.s32.totalorder %s168, %s170
      %p174 = scmp.eq.s32.totalorder %s29, 0
      %p175 = por %p173, %p174
      %p176 = scmp.ne.s32.totalorder %s168, %s170
      %p177 = scmp.eq.s32.totalorder %s34, 7
      %p178 = por %p176, %p177
      %p179 = scmp.ne.s32.totalorder %s170, %s171
      %p180 = scmp.eq.s32.totalorder %s34, 0
      %p181 = por %p179, %p180
      %p182 = scmp.ne.s32.totalorder %s170, %s171
      %p183 = scmp.eq.s32.totalorder %s35, 7
      %p184 = por %p182, %p183
      %p186 = scmp.ne.s32.totalorder %s171, %s185
      %p187 = scmp.eq.s32.totalorder %s35, 0
      %p188 = por %p186, %p187
      %s190 = sadd.s32 %s189, 1
      %p193 = scmp.eq.s32.totalorder %s29, 7
      %p194 = scmp.ne.s32.totalorder %s189, %s191
      %p195 = scmp.eq.s32.totalorder %s29, 0
      %p196 = por %p194, %p195
      %p197 = scmp.ne.s32.totalorder %s189, %s191
      %p198 = scmp.eq.s32.totalorder %s34, 7
      %p199 = por %p197, %p198
      %p200 = scmp.ne.s32.totalorder %s191, %s192
      %p201 = scmp.eq.s32.totalorder %s34, 0
      %p202 = por %p200, %p201
      %p203 = scmp.ne.s32.totalorder %s191, %s192
      %p204 = scmp.eq.s32.totalorder %s35, 7
      %p205 = por %p203, %p204
      %p207 = scmp.ne.s32.totalorder %s192, %s206
      %p208 = scmp.eq.s32.totalorder %s35, 0
      %p209 = por %p207, %p208
      %s211 = sadd.s32 %s210, 1
      %p214 = scmp.eq.s32.totalorder %s29, 7
      %p215 = scmp.ne.s32.totalorder %s210, %s212
      %p216 = scmp.eq.s32.totalorder %s29, 0
      %p217 = por %p215, %p216
      %p218 = scmp.ne.s32.totalorder %s210, %s212
      %p219 = scmp.eq.s32.totalorder %s34, 7
      %p220 = por %p218, %p219
      %p221 = scmp.ne.s32.totalorder %s212, %s213
      %p222 = scmp.eq.s32.totalorder %s34, 0
      %p223 = por %p221, %p222
      %p224 = scmp.ne.s32.totalorder %s212, %s213
      %p225 = scmp.eq.s32.totalorder %s35, 7
      %p226 = por %p224, %p225
      %p228 = scmp.ne.s32.totalorder %s213, %s227
      %p229 = scmp.eq.s32.totalorder %s35, 0
      %p230 = por %p228, %p229
      %s232 = sadd.s32 %s231, 1
      %p235 = scmp.eq.s32.totalorder %s29, 7
      %p236 = scmp.ne.s32.totalorder %s231, %s233
      %p237 = scmp.eq.s32.totalorder %s29, 0
      %p238 = por %p236, %p237
      %p239 = scmp.ne.s32.totalorder %s231, %s233
      %p240 = scmp.eq.s32.totalorder %s34, 7
      %p241 = por %p239, %p240
      %p242 = scmp.ne.s32.totalorder %s233, %s234
      %p243 = scmp.eq.s32.totalorder %s34, 0
      %p244 = por %p242, %p243
      %p245 = scmp.ne.s32.totalorder %s233, %s234
      %p246 = scmp.eq.s32.totalorder %s35, 7
      %p247 = por %p245, %p246
      %p249 = scmp.ne.s32.totalorder %s234, %s248
      %p250 = scmp.eq.s32.totalorder %s35, 0
      %p251 = por %p249, %p250
      %s253 = sadd.s32 %s252, 1
      %p256 = scmp.eq.s32.totalorder %s29, 7
      %p257 = scmp.ne.s32.totalorder %s252, %s254
      %p258 = scmp.eq.s32.totalorder %s29, 0
      %p259 = por %p257, %p258
      %p260 = scmp.ne.s32.totalorder %s252, %s254
      %p261 = scmp.eq.s32.totalorder %s34, 7
      %p262 = por %p260, %p261
      %p263 = scmp.ne.s32.totalorder %s254, %s255
      %p264 = scmp.eq.s32.totalorder %s34, 0
      %p265 = por %p263, %p264
      %p266 = scmp.ne.s32.totalorder %s254, %s255
      %p267 = scmp.eq.s32.totalorder %s35, 7
      %p268 = por %p266, %p267
      %p270 = scmp.ne.s32.totalorder %s255, %s269
      %p271 = scmp.eq.s32.totalorder %s35, 0
      %p272 = por %p270, %p271
      %s274 = sadd.s32 %s273, 1
      %p277 = scmp.eq.s32.totalorder %s29, 7
      %p278 = scmp.ne.s32.totalorder %s273, %s275
      %p279 = scmp.eq.s32.totalorder %s29, 0
      %p280 = por %p278, %p279
      %p281 = scmp.ne.s32.totalorder %s273, %s275
      %p282 = scmp.eq.s32.totalorder %s34, 7
      %p283 = por %p281, %p282
      %p284 = scmp.ne.s32.totalorder %s275, %s276
      %p285 = scmp.eq.s32.totalorder %s34, 0
      %p286 = por %p284, %p285
      %p287 = scmp.ne.s32.totalorder %s275, %s276
      %p288 = scmp.eq.s32.totalorder %s35, 7
      %p289 = por %p287, %p288
      %p291 = scmp.ne.s32.totalorder %s276, %s290
      %p292 = scmp.eq.s32.totalorder %s35, 0
      %p293 = por %p291, %p292
      %s295 = sadd.s32 %s294, 1
      %p298 = scmp.eq.s32.totalorder %s29, 7
      %p299 = scmp.ne.s32.totalorder %s294, %s296
      %p300 = scmp.eq.s32.totalorder %s29, 0
      %p301 = por %p299, %p300
      %p302 = scmp.ne.s32.totalorder %s294, %s296
      %p303 = scmp.eq.s32.totalorder %s34, 7
      %p304 = por %p302, %p303
      %p305 = scmp.ne.s32.totalorder %s296, %s297
      %p306 = scmp.eq.s32.totalorder %s34, 0
      %p307 = por %p305, %p306
      %p308 = scmp.ne.s32.totalorder %s296, %s297
      %p309 = scmp.eq.s32.totalorder %s35, 7
      %p310 = por %p308, %p309
      %p312 = scmp.ne.s32.totalorder %s297, %s311
      %p313 = scmp.eq.s32.totalorder %s35, 0
      %p314 = por %p312, %p313
      %s315 = ssub.s32 %s29, %s36
      %p316 = scmp.eq.s32.totalorder %s315, 0
      %s318 = sadd.s32 %s317, 1
      %s319 = scalar_select %p316, %s317, %s318
      %p322 = pneg %p316
      %p323 = scmp.eq.s32.totalorder %s29, 7
      %p324 = por %p322, %p323
      %p325 = scmp.ne.s32.totalorder %s317, %s320
      %p326 = scmp.eq.s32.totalorder %s29, 0
      %p327 = por %p325, %p326
      %p328 = scmp.ne.s32.totalorder %s317, %s320
      %p329 = scmp.eq.s32.totalorder %s34, 7
      %p330 = por %p328, %p329
      %p331 = scmp.ne.s32.totalorder %s320, %s321
      %p332 = scmp.eq.s32.totalorder %s34, 0
      %p333 = por %p331, %p332
      %p334 = scmp.ne.s32.totalorder %s320, %s321
      %p335 = scmp.eq.s32.totalorder %s35, 7
      %p336 = por %p334, %p335
      %p338 = scmp.ne.s32.totalorder %s321, %s337
      %p339 = scmp.eq.s32.totalorder %s35, 0
      %p340 = por %p338, %p339
      %p341 = scmp.le.s32.totalorder 1, %s29
      %p342 = scmp.lt.s32.totalorder %s29, 9
      %p343 = pnand %p341, %p342
      %p344 = pneg %p343
      // Predicated region
      $region9: #{tpu_custom_call.1} parent=5 // pred_check
        _
      $region10: #{tpu_custom_call.1} parent=5 // pred_check_branch
        %346 = sbr.rel (%p343) target = $region12
      $region11: #{tpu_custom_call.1} parent=5 // pred_region
        %s347 = ssub.s32 %s29, 1
        // Predicated region
        $region13: #{tpu_custom_call.1} parent=11 // pred_check
          %p348 = pneg %p76
        $region14: #{tpu_custom_call.1} parent=11 // pred_check_branch
          %350 = sbr.rel (%p348) target = $region16
        $region15: #{tpu_custom_call.1} parent=11 // pred_region
          _
        $region16: #{tpu_custom_call.1} parent=11 // pred_fallthru
          _
        // Predicated region
        $region17: #{tpu_custom_call.1} parent=11 // pred_check
          %p351 = pneg %p97
        $region18: #{tpu_custom_call.1} parent=11 // pred_check_branch
          %353 = sbr.rel (%p351) target = $region20
        $region19: #{tpu_custom_call.1} parent=11 // pred_region
          _
        $region20: #{tpu_custom_call.1} parent=11 // pred_fallthru
          _
        // Predicated region
        $region21: #{tpu_custom_call.1} parent=11 // pred_check
          %p354 = pneg %p118
        $region22: #{tpu_custom_call.1} parent=11 // pred_check_branch
          %356 = sbr.rel (%p354) target = $region24
        $region23: #{tpu_custom_call.1} parent=11 // pred_region
          _
        $region24: #{tpu_custom_call.1} parent=11 // pred_fallthru
          _
        // Predicated region
        $region25: #{tpu_custom_call.1} parent=11 // pred_check
          %p357 = pneg %p139
        $region26: #{tpu_custom_call.1} parent=11 // pred_check_branch
          %359 = sbr.rel (%p357) target = $region28
        $region27: #{tpu_custom_call.1} parent=11 // pred_region
          _
        $region28: #{tpu_custom_call.1} parent=11 // pred_fallthru
          _
        // Predicated region
        $region29: #{tpu_custom_call.1} parent=11 // pred_check
          %p360 = pneg %p160
        $region30: #{tpu_custom_call.1} parent=11 // pred_check_branch
          %362 = sbr.rel (%p360) target = $region32
        $region31: #{tpu_custom_call.1} parent=11 // pred_region
          %s364 = ssub.s32 64, 64
          %365 = vsyncadd [#allocation5], %s364
          %s367 = sshll.u32 %s5, 4
          %s368 = int_to_ptr.vmem [resolvable:$true] %s367
          %370 = dma.vmem_to_smem %s368, 64, [#allocation6], [#allocation5]
        $region32: #{tpu_custom_call.1} parent=11 // pred_fallthru
          _
        // Predicated region
        $region33: #{tpu_custom_call.1} parent=11 // pred_check
          %p371 = pneg %p181
        $region34: #{tpu_custom_call.1} parent=11 // pred_check_branch
          %373 = sbr.rel (%p371) target = $region36
        $region35: #{tpu_custom_call.1} parent=11 // pred_region
          %s375 = ssub.s32 16, 16
          %376 = vsyncadd [#allocation8], %s375
          %s378 = sshll.u32 %s6, 4
          %s379 = int_to_ptr.vmem [resolvable:$true] %s378
          %381 = dma.vmem_to_smem %s379, 16, [#allocation7], [#allocation8]
        $region36: #{tpu_custom_call.1} parent=11 // pred_fallthru
          _
        // Predicated region
        $region37: #{tpu_custom_call.1} parent=11 // pred_check
          %p382 = pneg %p202
        $region38: #{tpu_custom_call.1} parent=11 // pred_check_branch
          %384 = sbr.rel (%p382) target = $region40
        $region39: #{tpu_custom_call.1} parent=11 // pred_region
          %s386 = ssub.s32 64, 64
          %387 = vsyncadd [#allocation8], %s386
          %s389 = sshll.u32 %s7, 4
          %s390 = int_to_ptr.vmem [resolvable:$true] %s389
          %392 = dma.vmem_to_smem %s390, 64, [#allocation9], [#allocation8]
        $region40: #{tpu_custom_call.1} parent=11 // pred_fallthru
          _
        // Predicated region
        $region41: #{tpu_custom_call.1} parent=11 // pred_check
          %p393 = pneg %p223
        $region42: #{tpu_custom_call.1} parent=11 // pred_check_branch
          %395 = sbr.rel (%p393) target = $region44
        $region43: #{tpu_custom_call.1} parent=11 // pred_region
          %s397 = ssub.s32 16, 16
          %398 = vsyncadd [#allocation11], %s397
          %s400 = sshll.u32 %s8, 4
          %s401 = int_to_ptr.vmem [resolvable:$true] %s400
          %403 = dma.vmem_to_smem %s401, 16, [#allocation10], [#allocation11]
        $region44: #{tpu_custom_call.1} parent=11 // pred_fallthru
          _
        // Predicated region
        $region45: #{tpu_custom_call.1} parent=11 // pred_check
          %p404 = pneg %p244
        $region46: #{tpu_custom_call.1} parent=11 // pred_check_branch
          %406 = sbr.rel (%p404) target = $region48
        $region47: #{tpu_custom_call.1} parent=11 // pred_region
          %s408 = ssub.s32 1024, 1024
          %409 = vsyncadd [#allocation13], %s408
          %s410 = sshll.u32 [#allocation12], 4
          %s411 = int_to_ptr.vmem [resolvable:$true] %s410
          %416 = dma.hbm_to_vmem [thread:$0]  %s9, 1024, %s411, [#allocation13], 64, 64, 4
        $region48: #{tpu_custom_call.1} parent=11 // pred_fallthru
          _
        // Predicated region
        $region49: #{tpu_custom_call.1} parent=11 // pred_check
          %p417 = pneg %p265
        $region50: #{tpu_custom_call.1} parent=11 // pred_check_branch
          %419 = sbr.rel (%p417) target = $region52
        $region51: #{tpu_custom_call.1} parent=11 // pred_region
          _
        $region52: #{tpu_custom_call.1} parent=11 // pred_fallthru
          _
        // Predicated region
        $region53: #{tpu_custom_call.1} parent=11 // pred_check
          %p420 = pneg %p286
        $region54: #{tpu_custom_call.1} parent=11 // pred_check_branch
          %422 = sbr.rel (%p420) target = $region56
        $region55: #{tpu_custom_call.1} parent=11 // pred_region
          %s424 = ssub.s32 1024, 1024
          %425 = vsyncadd [#allocation13], %s424
          %s426 = sshll.u32 [#allocation14], 4
          %s427 = int_to_ptr.vmem [resolvable:$true] %s426
          %432 = dma.hbm_to_vmem [thread:$0]  %s11, 1024, %s427, [#allocation13], 64, 64, 4
        $region56: #{tpu_custom_call.1} parent=11 // pred_fallthru
          _
        // Predicated region
        $region57: #{tpu_custom_call.1} parent=11 // pred_check
          %p433 = pneg %p307
        $region58: #{tpu_custom_call.1} parent=11 // pred_check_branch
          %435 = sbr.rel (%p433) target = $region60
        $region59: #{tpu_custom_call.1} parent=11 // pred_region
          _
        $region60: #{tpu_custom_call.1} parent=11 // pred_fallthru
          _
      $region12: #{tpu_custom_call.1} parent=5 // pred_fallthru
        _
      %p436 = scmp.lt.s32.totalorder %s29, 8
      // Predicated region
      $region61: #{tpu_custom_call.1} parent=5 // pred_check
        %p437 = pneg %p436
      $region62: #{tpu_custom_call.1} parent=5 // pred_check_branch
        %439 = sbr.rel (%p437) target = $region64
      $region63: #{tpu_custom_call.1} parent=5 // pred_region
        // Predicated region
        $region65: #{tpu_custom_call.1} parent=63 // pred_check
          %p440 = pneg %p49
        $region66: #{tpu_custom_call.1} parent=63 // pred_check_branch
          %442 = sbr.rel (%p440) target = $region68
        $region67: #{tpu_custom_call.1} parent=63 // pred_region
          %s443 = sand.u32 %s39, 1
          %s444 = scalar_lea.sflag [#allocation3], %s443
          %s445 = sand.u32 %s39, 1
          %s446 = smul.addr %s445, 64
          %s447 = scalar_lea.vmem [#allocation2], %s446
          %s448 = smul.u32 4, %s29
          %s450 = ssub.s32 1024, 1024
          %451 = vsyncadd %s444, %s450
          %s452 = smul.addr %s448, 4
          %s453 = smul.addr %s452, 64
          %s454 = scalar_lea.hbm %s0, %s453
          %s455 = sshll.u32 %s447, 4
          %s456 = int_to_ptr.vmem [resolvable:$true] %s455
          %461 = dma.hbm_to_vmem [thread:$0]  %s454, 1024, %s456, %s444, 256, 256, 16
        $region68: #{tpu_custom_call.1} parent=63 // pred_fallthru
          _
      $region64: #{tpu_custom_call.1} parent=5 // pred_fallthru
        _
      %p462 = scmp.le.s32.totalorder 1, %s29
      %p463 = scmp.lt.s32.totalorder %s29, 9
      %p464 = pnand %p462, %p463
      %p465 = pneg %p464
      // Predicated region
      $region69: #{tpu_custom_call.1} parent=5 // pred_check
        _
      $region70: #{tpu_custom_call.1} parent=5 // pred_check_branch
        %467 = sbr.rel (%p464) target = $region72
      $region71: #{tpu_custom_call.1} parent=5 // pred_region
        %s468 = ssub.s32 %s29, 1
        %s469 = sand.u32 %s42, 1
        %s470 = scalar_lea.sflag [#allocation3], %s469
        %s471 = sand.u32 %s42, 1
        %s472 = smul.addr %s471, 64
        %s473 = scalar_lea.vmem [#allocation2], %s472
        // Predicated region
        $region73: #{tpu_custom_call.1} parent=71 // pred_check
          %p474 = pneg %p55
        $region74: #{tpu_custom_call.1} parent=71 // pred_check_branch
          %476 = sbr.rel (%p474) target = $region76
        $region75: #{tpu_custom_call.1} parent=71 // pred_region
          %477 = dma.done %s470, 1024
        $region76: #{tpu_custom_call.1} parent=71 // pred_fallthru
          _
        // Predicated region
        $region77: #{tpu_custom_call.1} parent=71 // pred_check
          %p478 = pneg %p160
        $region78: #{tpu_custom_call.1} parent=71 // pred_check_branch
          %480 = sbr.rel (%p478) target = $region80
        $region79: #{tpu_custom_call.1} parent=71 // pred_region
          %481 = dma.done [#allocation5], 64
        $region80: #{tpu_custom_call.1} parent=71 // pred_fallthru
          _
        // Predicated region
        $region81: #{tpu_custom_call.1} parent=71 // pred_check
          %p482 = pneg %p181
        $region82: #{tpu_custom_call.1} parent=71 // pred_check_branch
          %484 = sbr.rel (%p482) target = $region84
        $region83: #{tpu_custom_call.1} parent=71 // pred_region
          %485 = dma.done [#allocation8], 16
        $region84: #{tpu_custom_call.1} parent=71 // pred_fallthru
          _
        // Predicated region
        $region85: #{tpu_custom_call.1} parent=71 // pred_check
          %p486 = pneg %p202
        $region86: #{tpu_custom_call.1} parent=71 // pred_check_branch
          %488 = sbr.rel (%p486) target = $region88
        $region87: #{tpu_custom_call.1} parent=71 // pred_region
          %489 = dma.done [#allocation8], 64
        $region88: #{tpu_custom_call.1} parent=71 // pred_fallthru
          _
        // Predicated region
        $region89: #{tpu_custom_call.1} parent=71 // pred_check
          %p490 = pneg %p223
        $region90: #{tpu_custom_call.1} parent=71 // pred_check_branch
          %492 = sbr.rel (%p490) target = $region92
        $region91: #{tpu_custom_call.1} parent=71 // pred_region
          %493 = dma.done [#allocation11], 16
        $region92: #{tpu_custom_call.1} parent=71 // pred_fallthru
          _
        // Predicated region
        $region93: #{tpu_custom_call.1} parent=71 // pred_check
          %p494 = pneg %p244
        $region94: #{tpu_custom_call.1} parent=71 // pred_check_branch
          %496 = sbr.rel (%p494) target = $region96
        $region95: #{tpu_custom_call.1} parent=71 // pred_region
          %497 = dma.done [#allocation13], 1024
        $region96: #{tpu_custom_call.1} parent=71 // pred_fallthru
          _
        // Predicated region
        $region97: #{tpu_custom_call.1} parent=71 // pred_check
          %p498 = pneg %p286
        $region98: #{tpu_custom_call.1} parent=71 // pred_check_branch
          %500 = sbr.rel (%p498) target = $region100
        $region99: #{tpu_custom_call.1} parent=71 // pred_region
          %501 = dma.done [#allocation13], 1024
        $region100: #{tpu_custom_call.1} parent=71 // pred_fallthru
          _
        %502 = sfence
        %s503 = sand.u32 %s42, 1
        %s504 = scalar_lea.sflag [#allocation3], %s503
        %s505 = sand.u32 %s42, 1
        %s506 = smul.addr %s505, 64
        %s507 = scalar_lea.vmem [#allocation2], %s506
        %p508 = pneg %p55
        %p509 = pneg %p52
        %p510 = pneg %p76
        %p511 = pneg %p73
        %p512 = pneg %p97
        %p513 = pneg %p94
        %p514 = pneg %p118
        %p515 = pneg %p115
        %p516 = pneg %p139
        %p517 = pneg %p136
        %p518 = pneg %p160
        %p519 = pneg %p157
        %p520 = pneg %p181
        %p521 = pneg %p178
        %p522 = pneg %p202
        %p523 = pneg %p199
        %p524 = pneg %p223
        %p525 = pneg %p220
        %p526 = pneg %p244
        %p527 = pneg %p241
        %p528 = pneg %p265
        %p529 = pneg %p262
        %p530 = pneg %p286
        %p531 = pneg %p283
        %p532 = pneg %p307
        %p533 = pneg %p304
        %p534 = pneg %p333
        %p535 = pneg %p330
        %s536 = sand.u32 %s320, 1
        %s537 = scalar_lea.sflag [#allocation4], %s536
        %s538 = sand.u32 %s320, 1
        %s539 = smul.addr %s538, 64
        %s540 = scalar_lea.vmem [#allocation15], %s539
        %s541 = smul.u32 4, %s34
        %s542 = smul.u32 4, %s34
        %v544 = vld [vmem:[%s1] sm:$0x1]
        %v545 = vld [vmem:[%s2] sm:$0x1]
        %v546 = vld [vmem:[%s3] sm:$0x1]
        %v547 = vld [vmem:[%s4] sm:$0x1]
        %v548 = vld [vmem:[%s473] sm:$0xf]
        %v549 = vld [vmem:[%s473 + $0x10] sm:$0xf]
        %v550 = vld [vmem:[%s473 + $0x20] sm:$0xf]
        %v551 = vld [vmem:[%s473 + $0x30] sm:$0xf]
        %v552 = vunpack.c.l.bf16 %v548
        %v553 = vunpack.c.l.bf16 %v549
        %v554 = vunpack.c.l.bf16 %v550
        %v555 = vunpack.c.l.bf16 %v551
        %v556 = vld [vmem:[%s473 + $0x4] sm:$0xf]
        %v557 = vld [vmem:[%s473 + $0x14] sm:$0xf]
        %v558 = vld [vmem:[%s473 + $0x24] sm:$0xf]
        %v559 = vld [vmem:[%s473 + $0x34] sm:$0xf]
        %v560 = vunpack.c.l.bf16 %v556
        %v561 = vunpack.c.l.bf16 %v557
        %v562 = vunpack.c.l.bf16 %v558
        %v563 = vunpack.c.l.bf16 %v559
        %v564 = vld [vmem:[%s473 + $0x8] sm:$0xf]
        %v565 = vld [vmem:[%s473 + $0x18] sm:$0xf]
        %v566 = vld [vmem:[%s473 + $0x28] sm:$0xf]
        %v567 = vld [vmem:[%s473 + $0x38] sm:$0xf]
        %v568 = vunpack.c.l.bf16 %v564
        %v569 = vunpack.c.l.bf16 %v565
        %v570 = vunpack.c.l.bf16 %v566
        %v571 = vunpack.c.l.bf16 %v567
        %v572 = vld [vmem:[%s473 + $0xc] sm:$0xf]
        %v573 = vld [vmem:[%s473 + $0x1c] sm:$0xf]
        %v574 = vld [vmem:[%s473 + $0x2c] sm:$0xf]
        %v575 = vld [vmem:[%s473 + $0x3c] sm:$0xf]
        %v576 = vunpack.c.l.bf16 %v572
        %v577 = vunpack.c.l.bf16 %v573
        %v578 = vunpack.c.l.bf16 %v574
        %v579 = vunpack.c.l.bf16 %v575
        %580 = vadd.xlane.f32.xlu0 %v552
        %v581 = vpop.xlane.xlu0 %580
        %582 = vadd.xlane.f32.xlu0 %v553
        %v583 = vpop.xlane.xlu0 %582
        %584 = vadd.xlane.f32.xlu0 %v554
        %v585 = vpop.xlane.xlu0 %584
        %586 = vadd.xlane.f32.xlu0 %v555
        %v587 = vpop.xlane.xlu0 %586
        %v588 = vrcp.pop 128.0
        %v589 = vmul.f32 %v581, %v588
        %v590 = vmul.f32 %v583, %v588
        %v591 = vmul.f32 %v585, %v588
        %v592 = vmul.f32 %v587, %v588
        %v593 = vsub.f32 %v552, %v589
        %v594 = vsub.f32 %v553, %v590
        %v595 = vsub.f32 %v554, %v591
        %v596 = vsub.f32 %v555, %v592
        %v597 = vmul.f32 %v593, %v593
        %v598 = vmul.f32 %v594, %v594
        %v599 = vmul.f32 %v595, %v595
        %v600 = vmul.f32 %v596, %v596
        %601 = vadd.xlane.f32.xlu0 %v597
        %v602 = vpop.xlane.xlu0 %601
        %603 = vadd.xlane.f32.xlu0 %v598
        %v604 = vpop.xlane.xlu0 %603
        %605 = vadd.xlane.f32.xlu0 %v599
        %v606 = vpop.xlane.xlu0 %605
        %607 = vadd.xlane.f32.xlu0 %v600
        %v608 = vpop.xlane.xlu0 %607
        %v609 = vmul.f32 %v602, %v588
        %v610 = vmul.f32 %v604, %v588
        %v611 = vmul.f32 %v606, %v588
        %v612 = vmul.f32 %v608, %v588
        %v613 = vadd.f32 %v609, 1e-05
        %v614 = vadd.f32 %v610, 1e-05
        %v615 = vadd.f32 %v611, 1e-05
        %v616 = vadd.f32 %v612, 1e-05
        %v617 = vrsqrt.pop %v613
        %v618 = vrsqrt.pop %v614
        %v619 = vrsqrt.pop %v615
        %v620 = vrsqrt.pop %v616
        %v621 = vmul.f32 %v593, %v617
        %v622 = vmul.f32 %v594, %v618
        %v623 = vmul.f32 %v595, %v619
        %v624 = vmul.f32 %v596, %v620
        %v626 = vlaneseq
        %v627 = vshrl.u32 %v626, 7
        %v628 = vsub.s32 0, %v627
        %v629 = vrot.slane %v544, %v628
        %v631 = vmul.f32 %v621, %v629
        %v632 = vmul.f32 %v622, %v629
        %v633 = vmul.f32 %v623, %v629
        %v634 = vmul.f32 %v624, %v629
        %v636 = vlaneseq
        %v637 = vshrl.u32 %v636, 7
        %v638 = vsub.s32 0, %v637
        %v639 = vrot.slane %v545, %v638
        %v641 = vadd.f32 %v631, %v639
        %v642 = vadd.f32 %v632, %v639
        %v643 = vadd.f32 %v633, %v639
        %v644 = vadd.f32 %v634, %v639
        %645 = vadd.xlane.f32.xlu0 %v560
        %v646 = vpop.xlane.xlu0 %645
        %647 = vadd.xlane.f32.xlu0 %v561
        %v648 = vpop.xlane.xlu0 %647
        %649 = vadd.xlane.f32.xlu0 %v562
        %v650 = vpop.xlane.xlu0 %649
        %651 = vadd.xlane.f32.xlu0 %v563
        %v652 = vpop.xlane.xlu0 %651
        %v653 = vmul.f32 %v646, %v588
        %v654 = vmul.f32 %v648, %v588
        %v655 = vmul.f32 %v650, %v588
        %v656 = vmul.f32 %v652, %v588
        %v657 = vsub.f32 %v560, %v653
        %v658 = vsub.f32 %v561, %v654
        %v659 = vsub.f32 %v562, %v655
        %v660 = vsub.f32 %v563, %v656
        %v661 = vmul.f32 %v657, %v657
        %v662 = vmul.f32 %v658, %v658
        %v663 = vmul.f32 %v659, %v659
        %v664 = vmul.f32 %v660, %v660
        %665 = vadd.xlane.f32.xlu0 %v661
        %v666 = vpop.xlane.xlu0 %665
        %667 = vadd.xlane.f32.xlu0 %v662
        %v668 = vpop.xlane.xlu0 %667
        %669 = vadd.xlane.f32.xlu0 %v663
        %v670 = vpop.xlane.xlu0 %669
        %671 = vadd.xlane.f32.xlu0 %v664
        %v672 = vpop.xlane.xlu0 %671
        %v673 = vmul.f32 %v666, %v588
        %v674 = vmul.f32 %v668, %v588
        %v675 = vmul.f32 %v670, %v588
        %v676 = vmul.f32 %v672, %v588
        %v677 = vadd.f32 %v673, 1e-05
        %v678 = vadd.f32 %v674, 1e-05
        %v679 = vadd.f32 %v675, 1e-05
        %v680 = vadd.f32 %v676, 1e-05
        %v681 = vrsqrt.pop %v677
        %v682 = vrsqrt.pop %v678
        %v683 = vrsqrt.pop %v679
        %v684 = vrsqrt.pop %v680
        %v685 = vmul.f32 %v657, %v681
        %v686 = vmul.f32 %v658, %v682
        %v687 = vmul.f32 %v659, %v683
        %v688 = vmul.f32 %v660, %v684
        %v689 = vmul.f32 %v685, %v629
        %v690 = vmul.f32 %v686, %v629
        %v691 = vmul.f32 %v687, %v629
        %v692 = vmul.f32 %v688, %v629
        %v693 = vadd.f32 %v689, %v639
        %v694 = vadd.f32 %v690, %v639
        %v695 = vadd.f32 %v691, %v639
        %v696 = vadd.f32 %v692, %v639
        %697 = vadd.xlane.f32.xlu0 %v568
        %v698 = vpop.xlane.xlu0 %697
        %699 = vadd.xlane.f32.xlu0 %v569
        %v700 = vpop.xlane.xlu0 %699
        %701 = vadd.xlane.f32.xlu0 %v570
        %v702 = vpop.xlane.xlu0 %701
        %703 = vadd.xlane.f32.xlu0 %v571
        %v704 = vpop.xlane.xlu0 %703
        %v705 = vmul.f32 %v698, %v588
        %v706 = vmul.f32 %v700, %v588
        %v707 = vmul.f32 %v702, %v588
        %v708 = vmul.f32 %v704, %v588
        %v709 = vsub.f32 %v568, %v705
        %v710 = vsub.f32 %v569, %v706
        %v711 = vsub.f32 %v570, %v707
        %v712 = vsub.f32 %v571, %v708
        %v713 = vmul.f32 %v709, %v709
        %v714 = vmul.f32 %v710, %v710
        %v715 = vmul.f32 %v711, %v711
        %v716 = vmul.f32 %v712, %v712
        %717 = vadd.xlane.f32.xlu0 %v713
        %v718 = vpop.xlane.xlu0 %717
        %719 = vadd.xlane.f32.xlu0 %v714
        %v720 = vpop.xlane.xlu0 %719
        %721 = vadd.xlane.f32.xlu0 %v715
        %v722 = vpop.xlane.xlu0 %721
        %723 = vadd.xlane.f32.xlu0 %v716
        %v724 = vpop.xlane.xlu0 %723
        %v725 = vmul.f32 %v718, %v588
        %v726 = vmul.f32 %v720, %v588
        %v727 = vmul.f32 %v722, %v588
        %v728 = vmul.f32 %v724, %v588
        %v729 = vadd.f32 %v725, 1e-05
        %v730 = vadd.f32 %v726, 1e-05
        %v731 = vadd.f32 %v727, 1e-05
        %v732 = vadd.f32 %v728, 1e-05
        %v733 = vrsqrt.pop %v729
        %v734 = vrsqrt.pop %v730
        %v735 = vrsqrt.pop %v731
        %v736 = vrsqrt.pop %v732
        %v737 = vmul.f32 %v709, %v733
        %v738 = vmul.f32 %v710, %v734
        %v739 = vmul.f32 %v711, %v735
        %v740 = vmul.f32 %v712, %v736
        %v741 = vmul.f32 %v737, %v629
        %v742 = vmul.f32 %v738, %v629
        %v743 = vmul.f32 %v739, %v629
        %v744 = vmul.f32 %v740, %v629
        %v745 = vadd.f32 %v741, %v639
        %v746 = vadd.f32 %v742, %v639
        %v747 = vadd.f32 %v743, %v639
        %v748 = vadd.f32 %v744, %v639
        %749 = vadd.xlane.f32.xlu0 %v576
        %v750 = vpop.xlane.xlu0 %749
        %751 = vadd.xlane.f32.xlu0 %v577
        %v752 = vpop.xlane.xlu0 %751
        %753 = vadd.xlane.f32.xlu0 %v578
        %v754 = vpop.xlane.xlu0 %753
        %755 = vadd.xlane.f32.xlu0 %v579
        %v756 = vpop.xlane.xlu0 %755
        %v757 = vmul.f32 %v750, %v588
        %v758 = vmul.f32 %v752, %v588
        %v759 = vmul.f32 %v754, %v588
        %v760 = vmul.f32 %v756, %v588
        %v761 = vsub.f32 %v576, %v757
        %v762 = vsub.f32 %v577, %v758
        %v763 = vsub.f32 %v578, %v759
        %v764 = vsub.f32 %v579, %v760
        %v765 = vmul.f32 %v761, %v761
        %v766 = vmul.f32 %v762, %v762
        %v767 = vmul.f32 %v763, %v763
        %v768 = vmul.f32 %v764, %v764
        %769 = vadd.xlane.f32.xlu0 %v765
        %v770 = vpop.xlane.xlu0 %769
        %771 = vadd.xlane.f32.xlu0 %v766
        %v772 = vpop.xlane.xlu0 %771
        %773 = vadd.xlane.f32.xlu0 %v767
        %v774 = vpop.xlane.xlu0 %773
        %775 = vadd.xlane.f32.xlu0 %v768
        %v776 = vpop.xlane.xlu0 %775
        %v777 = vmul.f32 %v770, %v588
        %v778 = vmul.f32 %v772, %v588
        %v779 = vmul.f32 %v774, %v588
        %v780 = vmul.f32 %v776, %v588
        %v781 = vadd.f32 %v777, 1e-05
        %v782 = vadd.f32 %v778, 1e-05
        %v783 = vadd.f32 %v779, 1e-05
        %v784 = vadd.f32 %v780, 1e-05
        %v785 = vrsqrt.pop %v781
        %v786 = vrsqrt.pop %v782
        %v787 = vrsqrt.pop %v783
        %v788 = vrsqrt.pop %v784
        %v789 = vmul.f32 %v761, %v785
        %v790 = vmul.f32 %v762, %v786
        %v791 = vmul.f32 %v763, %v787
        %v792 = vmul.f32 %v764, %v788
        %v793 = vmul.f32 %v789, %v629
        %v794 = vmul.f32 %v790, %v629
        %v795 = vmul.f32 %v791, %v629
        %v796 = vmul.f32 %v792, %v629
        %v797 = vadd.f32 %v793, %v639
        %v798 = vadd.f32 %v794, %v639
        %v799 = vadd.f32 %v795, %v639
        %v800 = vadd.f32 %v796, %v639
        %s801 = sld [smem:[#allocation6]]
        %v802 = vstv %s801
        %v803 = vmul.f32 %v641, %v802
        %v804 = vmul.f32 %v642, %v802
        %v805 = vmul.f32 %v643, %v802
        %v806 = vmul.f32 %v644, %v802
        %s807 = sld [smem:[#allocation6 + $0x1]]
        %v808 = vstv %s807
        %v809 = vmul.f32 %v693, %v808
        %v810 = vmul.f32 %v694, %v808
        %v811 = vmul.f32 %v695, %v808
        %v812 = vmul.f32 %v696, %v808
        %v813 = vadd.f32 %v803, %v809
        %v814 = vadd.f32 %v804, %v810
        %v815 = vadd.f32 %v805, %v811
        %v816 = vadd.f32 %v806, %v812
        %s817 = sld [smem:[#allocation6 + $0x2]]
        %v818 = vstv %s817
        %v819 = vmul.f32 %v745, %v818
        %v820 = vmul.f32 %v746, %v818
        %v821 = vmul.f32 %v747, %v818
        %v822 = vmul.f32 %v748, %v818
        %v823 = vadd.f32 %v813, %v819
        %v824 = vadd.f32 %v814, %v820
        %v825 = vadd.f32 %v815, %v821
        %v826 = vadd.f32 %v816, %v822
        %s827 = sld [smem:[#allocation6 + $0x3]]
        %v828 = vstv %s827
        %v829 = vmul.f32 %v797, %v828
        %v830 = vmul.f32 %v798, %v828
        %v831 = vmul.f32 %v799, %v828
        %v832 = vmul.f32 %v800, %v828
        %v833 = vadd.f32 %v823, %v829
        %v834 = vadd.f32 %v824, %v830
        %v835 = vadd.f32 %v825, %v831
        %v836 = vadd.f32 %v826, %v832
        %s837 = sld [smem:[#allocation7]]
        %v838 = vstv %s837
        %v839 = vadd.f32 %v833, %v838
        %v840 = vadd.f32 %v834, %v838
        %v841 = vadd.f32 %v835, %v838
        %v842 = vadd.f32 %v836, %v838
        %v843 = vmul.f32 %v839, 0.5
        %v844 = vmul.f32 %v840, 0.5
        %v845 = vmul.f32 %v841, 0.5
        %v846 = vmul.f32 %v842, 0.5
        %v847 = vmul.f32 %v839, 0.044715
        %v848 = vmul.f32 %v840, 0.044715
        %v849 = vmul.f32 %v841, 0.044715
        %v850 = vmul.f32 %v842, 0.044715
        %v851 = vmul.f32 %v847, %v839
        %v852 = vmul.f32 %v848, %v840
        %v853 = vmul.f32 %v849, %v841
        %v854 = vmul.f32 %v850, %v842
        %v855 = vmul.f32 %v851, %v839
        %v856 = vmul.f32 %v852, %v840
        %v857 = vmul.f32 %v853, %v841
        %v858 = vmul.f32 %v854, %v842
        %v859 = vadd.f32 %v839, %v855
        %v860 = vadd.f32 %v840, %v856
        %v861 = vadd.f32 %v841, %v857
        %v862 = vadd.f32 %v842, %v858
        %v863 = vmul.f32 %v859, 0.7978846
        %v864 = vmul.f32 %v860, 0.7978846
        %v865 = vmul.f32 %v861, 0.7978846
        %v866 = vmul.f32 %v862, 0.7978846
        %v867 = vtanh.pop %v863
        %v868 = vtanh.pop %v864
        %v869 = vtanh.pop %v865
        %v870 = vtanh.pop %v866
        %v871 = vadd.f32 %v867, 1.0
        %v872 = vadd.f32 %v868, 1.0
        %v873 = vadd.f32 %v869, 1.0
        %v874 = vadd.f32 %v870, 1.0
        %v875 = vmul.f32 %v843, %v871
        %v876 = vmul.f32 %v844, %v872
        %v877 = vmul.f32 %v845, %v873
        %v878 = vmul.f32 %v846, %v874
        %s879 = sld [smem:[#allocation6 + $0x80]]
        %v880 = vstv %s879
        %v881 = vmul.f32 %v641, %v880
        %v882 = vmul.f32 %v642, %v880
        %v883 = vmul.f32 %v643, %v880
        %v884 = vmul.f32 %v644, %v880
        %s885 = sld [smem:[#allocation6 + $0x81]]
        %v886 = vstv %s885
        %v887 = vmul.f32 %v693, %v886
        %v888 = vmul.f32 %v694, %v886
        %v889 = vmul.f32 %v695, %v886
        %v890 = vmul.f32 %v696, %v886
        %v891 = vadd.f32 %v881, %v887
        %v892 = vadd.f32 %v882, %v888
        %v893 = vadd.f32 %v883, %v889
        %v894 = vadd.f32 %v884, %v890
        %s895 = sld [smem:[#allocation6 + $0x82]]
        %v896 = vstv %s895
        %v897 = vmul.f32 %v745, %v896
        %v898 = vmul.f32 %v746, %v896
        %v899 = vmul.f32 %v747, %v896
        %v900 = vmul.f32 %v748, %v896
        %v901 = vadd.f32 %v891, %v897
        %v902 = vadd.f32 %v892, %v898
        %v903 = vadd.f32 %v893, %v899
        %v904 = vadd.f32 %v894, %v900
        %s905 = sld [smem:[#allocation6 + $0x83]]
        %v906 = vstv %s905
        %v907 = vmul.f32 %v797, %v906
        %v908 = vmul.f32 %v798, %v906
        %v909 = vmul.f32 %v799, %v906
        %v910 = vmul.f32 %v800, %v906
        %v911 = vadd.f32 %v901, %v907
        %v912 = vadd.f32 %v902, %v908
        %v913 = vadd.f32 %v903, %v909
        %v914 = vadd.f32 %v904, %v910
        %s915 = sld [smem:[#allocation7 + $0x1]]
        %v916 = vstv %s915
        %v917 = vadd.f32 %v911, %v916
        %v918 = vadd.f32 %v912, %v916
        %v919 = vadd.f32 %v913, %v916
        %v920 = vadd.f32 %v914, %v916
        %v921 = vmul.f32 %v917, 0.5
        %v922 = vmul.f32 %v918, 0.5
        %v923 = vmul.f32 %v919, 0.5
        %v924 = vmul.f32 %v920, 0.5
        %v925 = vmul.f32 %v917, 0.044715
        %v926 = vmul.f32 %v918, 0.044715
        %v927 = vmul.f32 %v919, 0.044715
        %v928 = vmul.f32 %v920, 0.044715
        %v929 = vmul.f32 %v925, %v917
        %v930 = vmul.f32 %v926, %v918
        %v931 = vmul.f32 %v927, %v919
        %v932 = vmul.f32 %v928, %v920
        %v933 = vmul.f32 %v929, %v917
        %v934 = vmul.f32 %v930, %v918
        %v935 = vmul.f32 %v931, %v919
        %v936 = vmul.f32 %v932, %v920
        %v937 = vadd.f32 %v917, %v933
        %v938 = vadd.f32 %v918, %v934
        %v939 = vadd.f32 %v919, %v935
        %v940 = vadd.f32 %v920, %v936
        %v941 = vmul.f32 %v937, 0.7978846
        %v942 = vmul.f32 %v938, 0.7978846
        %v943 = vmul.f32 %v939, 0.7978846
        %v944 = vmul.f32 %v940, 0.7978846
        %v945 = vtanh.pop %v941
        %v946 = vtanh.pop %v942
        %v947 = vtanh.pop %v943
        %v948 = vtanh.pop %v944
        %v949 = vadd.f32 %v945, 1.0
        %v950 = vadd.f32 %v946, 1.0
        %v951 = vadd.f32 %v947, 1.0
        %v952 = vadd.f32 %v948, 1.0
        %v953 = vmul.f32 %v921, %v949
        %v954 = vmul.f32 %v922, %v950
        %v955 = vmul.f32 %v923, %v951
        %v956 = vmul.f32 %v924, %v952
        %s957 = sld [smem:[#allocation6 + $0x100]]
        %v958 = vstv %s957
        %v959 = vmul.f32 %v641, %v958
        %v960 = vmul.f32 %v642, %v958
        %v961 = vmul.f32 %v643, %v958
        %v962 = vmul.f32 %v644, %v958
        %s963 = sld [smem:[#allocation6 + $0x101]]
        %v964 = vstv %s963
        %v965 = vmul.f32 %v693, %v964
        %v966 = vmul.f32 %v694, %v964
        %v967 = vmul.f32 %v695, %v964
        %v968 = vmul.f32 %v696, %v964
        %v969 = vadd.f32 %v959, %v965
        %v970 = vadd.f32 %v960, %v966
        %v971 = vadd.f32 %v961, %v967
        %v972 = vadd.f32 %v962, %v968
        %s973 = sld [smem:[#allocation6 + $0x102]]
        %v974 = vstv %s973
        %v975 = vmul.f32 %v745, %v974
        %v976 = vmul.f32 %v746, %v974
        %v977 = vmul.f32 %v747, %v974
        %v978 = vmul.f32 %v748, %v974
        %v979 = vadd.f32 %v969, %v975
        %v980 = vadd.f32 %v970, %v976
        %v981 = vadd.f32 %v971, %v977
        %v982 = vadd.f32 %v972, %v978
        %s983 = sld [smem:[#allocation6 + $0x103]]
        %v984 = vstv %s983
        %v985 = vmul.f32 %v797, %v984
        %v986 = vmul.f32 %v798, %v984
        %v987 = vmul.f32 %v799, %v984
        %v988 = vmul.f32 %v800, %v984
        %v989 = vadd.f32 %v979, %v985
        %v990 = vadd.f32 %v980, %v986
        %v991 = vadd.f32 %v981, %v987
        %v992 = vadd.f32 %v982, %v988
        %s993 = sld [smem:[#allocation7 + $0x2]]
        %v994 = vstv %s993
        %v995 = vadd.f32 %v989, %v994
        %v996 = vadd.f32 %v990, %v994
        %v997 = vadd.f32 %v991, %v994
        %v998 = vadd.f32 %v992, %v994
        %v999 = vmul.f32 %v995, 0.5
        %v1000 = vmul.f32 %v996, 0.5
        %v1001 = vmul.f32 %v997, 0.5
        %v1002 = vmul.f32 %v998, 0.5
        %v1003 = vmul.f32 %v995, 0.044715
        %v1004 = vmul.f32 %v996, 0.044715
        %v1005 = vmul.f32 %v997, 0.044715
        %v1006 = vmul.f32 %v998, 0.044715
        %v1007 = vmul.f32 %v1003, %v995
        %v1008 = vmul.f32 %v1004, %v996
        %v1009 = vmul.f32 %v1005, %v997
        %v1010 = vmul.f32 %v1006, %v998
        %v1011 = vmul.f32 %v1007, %v995
        %v1012 = vmul.f32 %v1008, %v996
        %v1013 = vmul.f32 %v1009, %v997
        %v1014 = vmul.f32 %v1010, %v998
        %v1015 = vadd.f32 %v995, %v1011
        %v1016 = vadd.f32 %v996, %v1012
        %v1017 = vadd.f32 %v997, %v1013
        %v1018 = vadd.f32 %v998, %v1014
        %v1019 = vmul.f32 %v1015, 0.7978846
        %v1020 = vmul.f32 %v1016, 0.7978846
        %v1021 = vmul.f32 %v1017, 0.7978846
        %v1022 = vmul.f32 %v1018, 0.7978846
        %v1023 = vtanh.pop %v1019
        %v1024 = vtanh.pop %v1020
        %v1025 = vtanh.pop %v1021
        %v1026 = vtanh.pop %v1022
        %v1027 = vadd.f32 %v1023, 1.0
        %v1028 = vadd.f32 %v1024, 1.0
        %v1029 = vadd.f32 %v1025, 1.0
        %v1030 = vadd.f32 %v1026, 1.0
        %v1031 = vmul.f32 %v999, %v1027
        %v1032 = vmul.f32 %v1000, %v1028
        %v1033 = vmul.f32 %v1001, %v1029
        %v1034 = vmul.f32 %v1002, %v1030
        %s1035 = sld [smem:[#allocation6 + $0x180]]
        %v1036 = vstv %s1035
        %v1037 = vmul.f32 %v641, %v1036
        %v1038 = vmul.f32 %v642, %v1036
        %v1039 = vmul.f32 %v643, %v1036
        %v1040 = vmul.f32 %v644, %v1036
        %s1041 = sld [smem:[#allocation6 + $0x181]]
        %v1042 = vstv %s1041
        %v1043 = vmul.f32 %v693, %v1042
        %v1044 = vmul.f32 %v694, %v1042
        %v1045 = vmul.f32 %v695, %v1042
        %v1046 = vmul.f32 %v696, %v1042
        %v1047 = vadd.f32 %v1037, %v1043
        %v1048 = vadd.f32 %v1038, %v1044
        %v1049 = vadd.f32 %v1039, %v1045
        %v1050 = vadd.f32 %v1040, %v1046
        %s1051 = sld [smem:[#allocation6 + $0x182]]
        %v1052 = vstv %s1051
        %v1053 = vmul.f32 %v745, %v1052
        %v1054 = vmul.f32 %v746, %v1052
        %v1055 = vmul.f32 %v747, %v1052
        %v1056 = vmul.f32 %v748, %v1052
        %v1057 = vadd.f32 %v1047, %v1053
        %v1058 = vadd.f32 %v1048, %v1054
        %v1059 = vadd.f32 %v1049, %v1055
        %v1060 = vadd.f32 %v1050, %v1056
        %s1061 = sld [smem:[#allocation6 + $0x183]]
        %v1062 = vstv %s1061
        %v1063 = vmul.f32 %v797, %v1062
        %v1064 = vmul.f32 %v798, %v1062
        %v1065 = vmul.f32 %v799, %v1062
        %v1066 = vmul.f32 %v800, %v1062
        %v1067 = vadd.f32 %v1057, %v1063
        %v1068 = vadd.f32 %v1058, %v1064
        %v1069 = vadd.f32 %v1059, %v1065
        %v1070 = vadd.f32 %v1060, %v1066
        %s1071 = sld [smem:[#allocation7 + $0x3]]
        %v1072 = vstv %s1071
        %v1073 = vadd.f32 %v1067, %v1072
        %v1074 = vadd.f32 %v1068, %v1072
        %v1075 = vadd.f32 %v1069, %v1072
        %v1076 = vadd.f32 %v1070, %v1072
        %v1077 = vmul.f32 %v1073, 0.5
        %v1078 = vmul.f32 %v1074, 0.5
        %v1079 = vmul.f32 %v1075, 0.5
        %v1080 = vmul.f32 %v1076, 0.5
        %v1081 = vmul.f32 %v1073, 0.044715
        %v1082 = vmul.f32 %v1074, 0.044715
        %v1083 = vmul.f32 %v1075, 0.044715
        %v1084 = vmul.f32 %v1076, 0.044715
        %v1085 = vmul.f32 %v1081, %v1073
        %v1086 = vmul.f32 %v1082, %v1074
        %v1087 = vmul.f32 %v1083, %v1075
        %v1088 = vmul.f32 %v1084, %v1076
        %v1089 = vmul.f32 %v1085, %v1073
        %v1090 = vmul.f32 %v1086, %v1074
        %v1091 = vmul.f32 %v1087, %v1075
        %v1092 = vmul.f32 %v1088, %v1076
        %v1093 = vadd.f32 %v1073, %v1089
        %v1094 = vadd.f32 %v1074, %v1090
        %v1095 = vadd.f32 %v1075, %v1091
        %v1096 = vadd.f32 %v1076, %v1092
        %v1097 = vmul.f32 %v1093, 0.7978846
        %v1098 = vmul.f32 %v1094, 0.7978846
        %v1099 = vmul.f32 %v1095, 0.7978846
        %v1100 = vmul.f32 %v1096, 0.7978846
        %v1101 = vtanh.pop %v1097
        %v1102 = vtanh.pop %v1098
        %v1103 = vtanh.pop %v1099
        %v1104 = vtanh.pop %v1100
        %v1105 = vadd.f32 %v1101, 1.0
        %v1106 = vadd.f32 %v1102, 1.0
        %v1107 = vadd.f32 %v1103, 1.0
        %v1108 = vadd.f32 %v1104, 1.0
        %v1109 = vmul.f32 %v1077, %v1105
        %v1110 = vmul.f32 %v1078, %v1106
        %v1111 = vmul.f32 %v1079, %v1107
        %v1112 = vmul.f32 %v1080, %v1108
        %s1113 = sld [smem:[#allocation9]]
        %v1114 = vstv %s1113
        %v1115 = vmul.f32 %v875, %v1114
        %v1116 = vmul.f32 %v876, %v1114
        %v1117 = vmul.f32 %v877, %v1114
        %v1118 = vmul.f32 %v878, %v1114
        %s1119 = sld [smem:[#allocation9 + $0x1]]
        %v1120 = vstv %s1119
        %v1121 = vmul.f32 %v953, %v1120
        %v1122 = vmul.f32 %v954, %v1120
        %v1123 = vmul.f32 %v955, %v1120
        %v1124 = vmul.f32 %v956, %v1120
        %v1125 = vadd.f32 %v1115, %v1121
        %v1126 = vadd.f32 %v1116, %v1122
        %v1127 = vadd.f32 %v1117, %v1123
        %v1128 = vadd.f32 %v1118, %v1124
        %s1129 = sld [smem:[#allocation9 + $0x2]]
        %v1130 = vstv %s1129
        %v1131 = vmul.f32 %v1031, %v1130
        %v1132 = vmul.f32 %v1032, %v1130
        %v1133 = vmul.f32 %v1033, %v1130
        %v1134 = vmul.f32 %v1034, %v1130
        %v1135 = vadd.f32 %v1125, %v1131
        %v1136 = vadd.f32 %v1126, %v1132
        %v1137 = vadd.f32 %v1127, %v1133
        %v1138 = vadd.f32 %v1128, %v1134
        %s1139 = sld [smem:[#allocation9 + $0x3]]
        %v1140 = vstv %s1139
        %v1141 = vmul.f32 %v1109, %v1140
        %v1142 = vmul.f32 %v1110, %v1140
        %v1143 = vmul.f32 %v1111, %v1140
        %v1144 = vmul.f32 %v1112, %v1140
        %v1145 = vadd.f32 %v1135, %v1141
        %v1146 = vadd.f32 %v1136, %v1142
        %v1147 = vadd.f32 %v1137, %v1143
        %v1148 = vadd.f32 %v1138, %v1144
        %v1149 = vadd.f32 %v552, %v1145
        %v1150 = vadd.f32 %v553, %v1146
        %v1151 = vadd.f32 %v554, %v1147
        %v1152 = vadd.f32 %v555, %v1148
        %s1153 = sld [smem:[#allocation10]]
        %v1154 = vstv %s1153
        %v1155 = vadd.f32 %v1149, %v1154
        %v1156 = vadd.f32 %v1150, %v1154
        %v1157 = vadd.f32 %v1151, %v1154
        %v1158 = vadd.f32 %v1152, %v1154
        %s1159 = sld [smem:[#allocation9 + $0x80]]
        %v1160 = vstv %s1159
        %v1161 = vmul.f32 %v875, %v1160
        %v1162 = vmul.f32 %v876, %v1160
        %v1163 = vmul.f32 %v877, %v1160
        %v1164 = vmul.f32 %v878, %v1160
        %s1165 = sld [smem:[#allocation9 + $0x81]]
        %v1166 = vstv %s1165
        %v1167 = vmul.f32 %v953, %v1166
        %v1168 = vmul.f32 %v954, %v1166
        %v1169 = vmul.f32 %v955, %v1166
        %v1170 = vmul.f32 %v956, %v1166
        %v1171 = vadd.f32 %v1161, %v1167
        %v1172 = vadd.f32 %v1162, %v1168
        %v1173 = vadd.f32 %v1163, %v1169
        %v1174 = vadd.f32 %v1164, %v1170
        %s1175 = sld [smem:[#allocation9 + $0x82]]
        %v1176 = vstv %s1175
        %v1177 = vmul.f32 %v1031, %v1176
        %v1178 = vmul.f32 %v1032, %v1176
        %v1179 = vmul.f32 %v1033, %v1176
        %v1180 = vmul.f32 %v1034, %v1176
        %v1181 = vadd.f32 %v1171, %v1177
        %v1182 = vadd.f32 %v1172, %v1178
        %v1183 = vadd.f32 %v1173, %v1179
        %v1184 = vadd.f32 %v1174, %v1180
        %s1185 = sld [smem:[#allocation9 + $0x83]]
        %v1186 = vstv %s1185
        %v1187 = vmul.f32 %v1109, %v1186
        %v1188 = vmul.f32 %v1110, %v1186
        %v1189 = vmul.f32 %v1111, %v1186
        %v1190 = vmul.f32 %v1112, %v1186
        %v1191 = vadd.f32 %v1181, %v1187
        %v1192 = vadd.f32 %v1182, %v1188
        %v1193 = vadd.f32 %v1183, %v1189
        %v1194 = vadd.f32 %v1184, %v1190
        %v1195 = vadd.f32 %v560, %v1191
        %v1196 = vadd.f32 %v561, %v1192
        %v1197 = vadd.f32 %v562, %v1193
        %v1198 = vadd.f32 %v563, %v1194
        %s1199 = sld [smem:[#allocation10 + $0x1]]
        %v1200 = vstv %s1199
        %v1201 = vadd.f32 %v1195, %v1200
        %v1202 = vadd.f32 %v1196, %v1200
        %v1203 = vadd.f32 %v1197, %v1200
        %v1204 = vadd.f32 %v1198, %v1200
        %s1205 = sld [smem:[#allocation9 + $0x100]]
        %v1206 = vstv %s1205
        %v1207 = vmul.f32 %v875, %v1206
        %v1208 = vmul.f32 %v876, %v1206
        %v1209 = vmul.f32 %v877, %v1206
        %v1210 = vmul.f32 %v878, %v1206
        %s1211 = sld [smem:[#allocation9 + $0x101]]
        %v1212 = vstv %s1211
        %v1213 = vmul.f32 %v953, %v1212
        %v1214 = vmul.f32 %v954, %v1212
        %v1215 = vmul.f32 %v955, %v1212
        %v1216 = vmul.f32 %v956, %v1212
        %v1217 = vadd.f32 %v1207, %v1213
        %v1218 = vadd.f32 %v1208, %v1214
        %v1219 = vadd.f32 %v1209, %v1215
        %v1220 = vadd.f32 %v1210, %v1216
        %s1221 = sld [smem:[#allocation9 + $0x102]]
        %v1222 = vstv %s1221
        %v1223 = vmul.f32 %v1031, %v1222
        %v1224 = vmul.f32 %v1032, %v1222
        %v1225 = vmul.f32 %v1033, %v1222
        %v1226 = vmul.f32 %v1034, %v1222
        %v1227 = vadd.f32 %v1217, %v1223
        %v1228 = vadd.f32 %v1218, %v1224
        %v1229 = vadd.f32 %v1219, %v1225
        %v1230 = vadd.f32 %v1220, %v1226
        %s1231 = sld [smem:[#allocation9 + $0x103]]
        %v1232 = vstv %s1231
        %v1233 = vmul.f32 %v1109, %v1232
        %v1234 = vmul.f32 %v1110, %v1232
        %v1235 = vmul.f32 %v1111, %v1232
        %v1236 = vmul.f32 %v1112, %v1232
        %v1237 = vadd.f32 %v1227, %v1233
        %v1238 = vadd.f32 %v1228, %v1234
        %v1239 = vadd.f32 %v1229, %v1235
        %v1240 = vadd.f32 %v1230, %v1236
        %v1241 = vadd.f32 %v568, %v1237
        %v1242 = vadd.f32 %v569, %v1238
        %v1243 = vadd.f32 %v570, %v1239
        %v1244 = vadd.f32 %v571, %v1240
        %s1245 = sld [smem:[#allocation10 + $0x2]]
        %v1246 = vstv %s1245
        %v1247 = vadd.f32 %v1241, %v1246
        %v1248 = vadd.f32 %v1242, %v1246
        %v1249 = vadd.f32 %v1243, %v1246
        %v1250 = vadd.f32 %v1244, %v1246
        %s1251 = sld [smem:[#allocation9 + $0x180]]
        %v1252 = vstv %s1251
        %v1253 = vmul.f32 %v875, %v1252
        %v1254 = vmul.f32 %v876, %v1252
        %v1255 = vmul.f32 %v877, %v1252
        %v1256 = vmul.f32 %v878, %v1252
        %s1257 = sld [smem:[#allocation9 + $0x181]]
        %v1258 = vstv %s1257
        %v1259 = vmul.f32 %v953, %v1258
        %v1260 = vmul.f32 %v954, %v1258
        %v1261 = vmul.f32 %v955, %v1258
        %v1262 = vmul.f32 %v956, %v1258
        %v1263 = vadd.f32 %v1253, %v1259
        %v1264 = vadd.f32 %v1254, %v1260
        %v1265 = vadd.f32 %v1255, %v1261
        %v1266 = vadd.f32 %v1256, %v1262
        %s1267 = sld [smem:[#allocation9 + $0x182]]
        %v1268 = vstv %s1267
        %v1269 = vmul.f32 %v1031, %v1268
        %v1270 = vmul.f32 %v1032, %v1268
        %v1271 = vmul.f32 %v1033, %v1268
        %v1272 = vmul.f32 %v1034, %v1268
        %v1273 = vadd.f32 %v1263, %v1269
        %v1274 = vadd.f32 %v1264, %v1270
        %v1275 = vadd.f32 %v1265, %v1271
        %v1276 = vadd.f32 %v1266, %v1272
        %s1277 = sld [smem:[#allocation9 + $0x183]]
        %v1278 = vstv %s1277
        %v1279 = vmul.f32 %v1109, %v1278
        %v1280 = vmul.f32 %v1110, %v1278
        %v1281 = vmul.f32 %v1111, %v1278
        %v1282 = vmul.f32 %v1112, %v1278
        %v1283 = vadd.f32 %v1273, %v1279
        %v1284 = vadd.f32 %v1274, %v1280
        %v1285 = vadd.f32 %v1275, %v1281
        %v1286 = vadd.f32 %v1276, %v1282
        %v1287 = vadd.f32 %v576, %v1283
        %v1288 = vadd.f32 %v577, %v1284
        %v1289 = vadd.f32 %v578, %v1285
        %v1290 = vadd.f32 %v579, %v1286
        %s1291 = sld [smem:[#allocation10 + $0x3]]
        %v1292 = vstv %s1291
        %v1293 = vadd.f32 %v1287, %v1292
        %v1294 = vadd.f32 %v1288, %v1292
        %v1295 = vadd.f32 %v1289, %v1292
        %v1296 = vadd.f32 %v1290, %v1292
        %1297 = vadd.xlane.f32.xlu0 %v1155
        %v1298 = vpop.xlane.xlu0 %1297
        %1299 = vadd.xlane.f32.xlu0 %v1156
        %v1300 = vpop.xlane.xlu0 %1299
        %1301 = vadd.xlane.f32.xlu0 %v1157
        %v1302 = vpop.xlane.xlu0 %1301
        %1303 = vadd.xlane.f32.xlu0 %v1158
        %v1304 = vpop.xlane.xlu0 %1303
        %1305 = vadd.xlane.f32.xlu0 %v1201
        %v1306 = vpop.xlane.xlu0 %1305
        %1307 = vadd.xlane.f32.xlu0 %v1202
        %v1308 = vpop.xlane.xlu0 %1307
        %1309 = vadd.xlane.f32.xlu0 %v1203
        %v1310 = vpop.xlane.xlu0 %1309
        %1311 = vadd.xlane.f32.xlu0 %v1204
        %v1312 = vpop.xlane.xlu0 %1311
        %1313 = vadd.xlane.f32.xlu0 %v1247
        %v1314 = vpop.xlane.xlu0 %1313
        %1315 = vadd.xlane.f32.xlu0 %v1248
        %v1316 = vpop.xlane.xlu0 %1315
        %1317 = vadd.xlane.f32.xlu0 %v1249
        %v1318 = vpop.xlane.xlu0 %1317
        %1319 = vadd.xlane.f32.xlu0 %v1250
        %v1320 = vpop.xlane.xlu0 %1319
        %1321 = vadd.xlane.f32.xlu0 %v1293
        %v1322 = vpop.xlane.xlu0 %1321
        %1323 = vadd.xlane.f32.xlu0 %v1294
        %v1324 = vpop.xlane.xlu0 %1323
        %1325 = vadd.xlane.f32.xlu0 %v1295
        %v1326 = vpop.xlane.xlu0 %1325
        %1327 = vadd.xlane.f32.xlu0 %v1296
        %v1328 = vpop.xlane.xlu0 %1327
        %v1329 = vmul.f32 %v1298, %v588
        %v1330 = vmul.f32 %v1300, %v588
        %v1331 = vmul.f32 %v1302, %v588
        %v1332 = vmul.f32 %v1304, %v588
        %v1333 = vmul.f32 %v1306, %v588
        %v1334 = vmul.f32 %v1308, %v588
        %v1335 = vmul.f32 %v1310, %v588
        %v1336 = vmul.f32 %v1312, %v588
        %v1337 = vmul.f32 %v1314, %v588
        %v1338 = vmul.f32 %v1316, %v588
        %v1339 = vmul.f32 %v1318, %v588
        %v1340 = vmul.f32 %v1320, %v588
        %v1341 = vmul.f32 %v1322, %v588
        %v1342 = vmul.f32 %v1324, %v588
        %v1343 = vmul.f32 %v1326, %v588
        %v1344 = vmul.f32 %v1328, %v588
        %v1345 = vsub.f32 %v1155, %v1329
        %v1346 = vsub.f32 %v1156, %v1330
        %v1347 = vsub.f32 %v1157, %v1331
        %v1348 = vsub.f32 %v1158, %v1332
        %v1349 = vsub.f32 %v1201, %v1333
        %v1350 = vsub.f32 %v1202, %v1334
        %v1351 = vsub.f32 %v1203, %v1335
        %v1352 = vsub.f32 %v1204, %v1336
        %v1353 = vsub.f32 %v1247, %v1337
        %v1354 = vsub.f32 %v1248, %v1338
        %v1355 = vsub.f32 %v1249, %v1339
        %v1356 = vsub.f32 %v1250, %v1340
        %v1357 = vsub.f32 %v1293, %v1341
        %v1358 = vsub.f32 %v1294, %v1342
        %v1359 = vsub.f32 %v1295, %v1343
        %v1360 = vsub.f32 %v1296, %v1344
        %v1361 = vmul.f32 %v1345, %v1345
        %v1362 = vmul.f32 %v1346, %v1346
        %v1363 = vmul.f32 %v1347, %v1347
        %v1364 = vmul.f32 %v1348, %v1348
        %v1365 = vmul.f32 %v1349, %v1349
        %v1366 = vmul.f32 %v1350, %v1350
        %v1367 = vmul.f32 %v1351, %v1351
        %v1368 = vmul.f32 %v1352, %v1352
        %v1369 = vmul.f32 %v1353, %v1353
        %v1370 = vmul.f32 %v1354, %v1354
        %v1371 = vmul.f32 %v1355, %v1355
        %v1372 = vmul.f32 %v1356, %v1356
        %v1373 = vmul.f32 %v1357, %v1357
        %v1374 = vmul.f32 %v1358, %v1358
        %v1375 = vmul.f32 %v1359, %v1359
        %v1376 = vmul.f32 %v1360, %v1360
        %1377 = vadd.xlane.f32.xlu0 %v1361
        %v1378 = vpop.xlane.xlu0 %1377
        %1379 = vadd.xlane.f32.xlu0 %v1362
        %v1380 = vpop.xlane.xlu0 %1379
        %1381 = vadd.xlane.f32.xlu0 %v1363
        %v1382 = vpop.xlane.xlu0 %1381
        %1383 = vadd.xlane.f32.xlu0 %v1364
        %v1384 = vpop.xlane.xlu0 %1383
        %1385 = vadd.xlane.f32.xlu0 %v1365
        %v1386 = vpop.xlane.xlu0 %1385
        %1387 = vadd.xlane.f32.xlu0 %v1366
        %v1388 = vpop.xlane.xlu0 %1387
        %1389 = vadd.xlane.f32.xlu0 %v1367
        %v1390 = vpop.xlane.xlu0 %1389
        %1391 = vadd.xlane.f32.xlu0 %v1368
        %v1392 = vpop.xlane.xlu0 %1391
        %1393 = vadd.xlane.f32.xlu0 %v1369
        %v1394 = vpop.xlane.xlu0 %1393
        %1395 = vadd.xlane.f32.xlu0 %v1370
        %v1396 = vpop.xlane.xlu0 %1395
        %1397 = vadd.xlane.f32.xlu0 %v1371
        %v1398 = vpop.xlane.xlu0 %1397
        %1399 = vadd.xlane.f32.xlu0 %v1372
        %v1400 = vpop.xlane.xlu0 %1399
        %1401 = vadd.xlane.f32.xlu0 %v1373
        %v1402 = vpop.xlane.xlu0 %1401
        %1403 = vadd.xlane.f32.xlu0 %v1374
        %v1404 = vpop.xlane.xlu0 %1403
        %1405 = vadd.xlane.f32.xlu0 %v1375
        %v1406 = vpop.xlane.xlu0 %1405
        %1407 = vadd.xlane.f32.xlu0 %v1376
        %v1408 = vpop.xlane.xlu0 %1407
        %v1409 = vmul.f32 %v1378, %v588
        %v1410 = vmul.f32 %v1380, %v588
        %v1411 = vmul.f32 %v1382, %v588
        %v1412 = vmul.f32 %v1384, %v588
        %v1413 = vmul.f32 %v1386, %v588
        %v1414 = vmul.f32 %v1388, %v588
        %v1415 = vmul.f32 %v1390, %v588
        %v1416 = vmul.f32 %v1392, %v588
        %v1417 = vmul.f32 %v1394, %v588
        %v1418 = vmul.f32 %v1396, %v588
        %v1419 = vmul.f32 %v1398, %v588
        %v1420 = vmul.f32 %v1400, %v588
        %v1421 = vmul.f32 %v1402, %v588
        %v1422 = vmul.f32 %v1404, %v588
        %v1423 = vmul.f32 %v1406, %v588
        %v1424 = vmul.f32 %v1408, %v588
        %v1425 = vadd.f32 %v1409, 1e-05
        %v1426 = vadd.f32 %v1410, 1e-05
        %v1427 = vadd.f32 %v1411, 1e-05
        %v1428 = vadd.f32 %v1412, 1e-05
        %v1429 = vadd.f32 %v1413, 1e-05
        %v1430 = vadd.f32 %v1414, 1e-05
        %v1431 = vadd.f32 %v1415, 1e-05
        %v1432 = vadd.f32 %v1416, 1e-05
        %v1433 = vadd.f32 %v1417, 1e-05
        %v1434 = vadd.f32 %v1418, 1e-05
        %v1435 = vadd.f32 %v1419, 1e-05
        %v1436 = vadd.f32 %v1420, 1e-05
        %v1437 = vadd.f32 %v1421, 1e-05
        %v1438 = vadd.f32 %v1422, 1e-05
        %v1439 = vadd.f32 %v1423, 1e-05
        %v1440 = vadd.f32 %v1424, 1e-05
        %v1441 = vrsqrt.pop %v1425
        %v1442 = vrsqrt.pop %v1426
        %v1443 = vrsqrt.pop %v1427
        %v1444 = vrsqrt.pop %v1428
        %v1445 = vrsqrt.pop %v1429
        %v1446 = vrsqrt.pop %v1430
        %v1447 = vrsqrt.pop %v1431
        %v1448 = vrsqrt.pop %v1432
        %v1449 = vrsqrt.pop %v1433
        %v1450 = vrsqrt.pop %v1434
        %v1451 = vrsqrt.pop %v1435
        %v1452 = vrsqrt.pop %v1436
        %v1453 = vrsqrt.pop %v1437
        %v1454 = vrsqrt.pop %v1438
        %v1455 = vrsqrt.pop %v1439
        %v1456 = vrsqrt.pop %v1440
        %v1457 = vmul.f32 %v1345, %v1441
        %v1458 = vmul.f32 %v1346, %v1442
        %v1459 = vmul.f32 %v1347, %v1443
        %v1460 = vmul.f32 %v1348, %v1444
        %v1461 = vmul.f32 %v1349, %v1445
        %v1462 = vmul.f32 %v1350, %v1446
        %v1463 = vmul.f32 %v1351, %v1447
        %v1464 = vmul.f32 %v1352, %v1448
        %v1465 = vmul.f32 %v1353, %v1449
        %v1466 = vmul.f32 %v1354, %v1450
        %v1467 = vmul.f32 %v1355, %v1451
        %v1468 = vmul.f32 %v1356, %v1452
        %v1469 = vmul.f32 %v1357, %v1453
        %v1470 = vmul.f32 %v1358, %v1454
        %v1471 = vmul.f32 %v1359, %v1455
        %v1472 = vmul.f32 %v1360, %v1456
        %v1474 = vlaneseq
        %v1475 = vshrl.u32 %v1474, 7
        %v1476 = vsub.s32 0, %v1475
        %v1477 = vrot.slane %v546, %v1476
        %v1479 = vmul.f32 %v1457, %v1477
        %v1480 = vmul.f32 %v1458, %v1477
        %v1481 = vmul.f32 %v1459, %v1477
        %v1482 = vmul.f32 %v1460, %v1477
        %v1483 = vmul.f32 %v1461, %v1477
        %v1484 = vmul.f32 %v1462, %v1477
        %v1485 = vmul.f32 %v1463, %v1477
        %v1486 = vmul.f32 %v1464, %v1477
        %v1487 = vmul.f32 %v1465, %v1477
        %v1488 = vmul.f32 %v1466, %v1477
        %v1489 = vmul.f32 %v1467, %v1477
        %v1490 = vmul.f32 %v1468, %v1477
        %v1491 = vmul.f32 %v1469, %v1477
        %v1492 = vmul.f32 %v1470, %v1477
        %v1493 = vmul.f32 %v1471, %v1477
        %v1494 = vmul.f32 %v1472, %v1477
        %v1496 = vlaneseq
        %v1497 = vshrl.u32 %v1496, 7
        %v1498 = vsub.s32 0, %v1497
        %v1499 = vrot.slane %v547, %v1498
        %v1501 = vadd.f32 %v1479, %v1499
        %v1502 = vadd.f32 %v1480, %v1499
        %v1503 = vadd.f32 %v1481, %v1499
        %v1504 = vadd.f32 %v1482, %v1499
        %v1505 = vadd.f32 %v1483, %v1499
        %v1506 = vadd.f32 %v1484, %v1499
        %v1507 = vadd.f32 %v1485, %v1499
        %v1508 = vadd.f32 %v1486, %v1499
        %v1509 = vadd.f32 %v1487, %v1499
        %v1510 = vadd.f32 %v1488, %v1499
        %v1511 = vadd.f32 %v1489, %v1499
        %v1512 = vadd.f32 %v1490, %v1499
        %v1513 = vadd.f32 %v1491, %v1499
        %v1514 = vadd.f32 %v1492, %v1499
        %v1515 = vadd.f32 %v1493, %v1499
        %v1516 = vadd.f32 %v1494, %v1499
        %v1517 = vpack.c.bf16 %v1502, %v1501
        %v1518 = vpack.c.bf16 %v1504, %v1503
        %v1519 = vpack.c.bf16 %v1506, %v1505
        %v1520 = vpack.c.bf16 %v1508, %v1507
        %v1521 = vpack.c.bf16 %v1510, %v1509
        %v1522 = vpack.c.bf16 %v1512, %v1511
        %v1523 = vpack.c.bf16 %v1514, %v1513
        %v1524 = vpack.c.bf16 %v1516, %v1515
        %v1525 = vld [vmem:[#allocation12] sm:$0xf]
        %v1526 = vld [vmem:[#allocation12 + $0x4] sm:$0xf]
        %v1527 = vld [vmem:[#allocation12 + $0x8] sm:$0xf]
        %v1528 = vld [vmem:[#allocation12 + $0xc] sm:$0xf]
        %v1529 = vld [vmem:[#allocation12 + $0x10] sm:$0xf]
        %v1530 = vld [vmem:[#allocation12 + $0x14] sm:$0xf]
        %v1531 = vld [vmem:[#allocation12 + $0x18] sm:$0xf]
        %v1532 = vld [vmem:[#allocation12 + $0x1c] sm:$0xf]
        %v1533 = vld [vmem:[#allocation12 + $0x20] sm:$0xf]
        %v1534 = vld [vmem:[#allocation12 + $0x24] sm:$0xf]
        %v1535 = vld [vmem:[#allocation12 + $0x28] sm:$0xf]
        %v1536 = vld [vmem:[#allocation12 + $0x2c] sm:$0xf]
        %v1537 = vld [vmem:[#allocation12 + $0x30] sm:$0xf]
        %v1538 = vld [vmem:[#allocation12 + $0x34] sm:$0xf]
        %v1539 = vld [vmem:[#allocation12 + $0x38] sm:$0xf]
        %v1540 = vld [vmem:[#allocation12 + $0x3c] sm:$0xf]
        %v1541 = vld [vmem:[%s10] sm:$0x1]
        %v1543 = vlaneseq
        %v1544 = vshrl.u32 %v1543, 7
        %v1545 = vsub.s32 0, %v1544
        %v1546 = vrot.slane %v1541, %v1545
        %v1564 = vunpack.c.l.b16 %v1525
        %v1565 = vunpack.c.l.b16 %v1526
        %v1566 = vunpack.c.l.b16 %v1527
        %v1567 = vunpack.c.l.b16 %v1528
        %v1568 = vunpack.c.l.b16 %v1529
        %v1569 = vunpack.c.l.b16 %v1530
        %v1570 = vunpack.c.l.b16 %v1531
        %v1571 = vunpack.c.l.b16 %v1532
        %v1572 = vunpack.c.l.b16 %v1533
        %v1573 = vunpack.c.l.b16 %v1534
        %v1574 = vunpack.c.l.b16 %v1535
        %v1575 = vunpack.c.l.b16 %v1536
        %v1576 = vunpack.c.l.b16 %v1537
        %v1577 = vunpack.c.l.b16 %v1538
        %v1578 = vunpack.c.l.b16 %v1539
        %v1579 = vunpack.c.l.b16 %v1540
        %v1580 = vpack.c.b16 %v1565, %v1564
        %v1581 = vpack.c.b16 %v1567, %v1566
        %v1582 = vpack.c.b16 %v1569, %v1568
        %v1583 = vpack.c.b16 %v1571, %v1570
        %v1584 = vpack.c.b16 %v1573, %v1572
        %v1585 = vpack.c.b16 %v1575, %v1574
        %v1586 = vpack.c.b16 %v1577, %v1576
        %v1587 = vpack.c.b16 %v1579, %v1578
        %1596 = vmatprep.subr.bf16.mxu0 0
        %1597 = vmatpush1.bf16.msra.mxu0 %v1580
        %1598 = vmatprep.subr.bf16.mxu0 0
        %1599 = vmatpush1.bf16.msra.mxu0 %v1581
        %1600 = vmatprep.subr.bf16.mxu0 0
        %1601 = vmatpush1.bf16.msra.mxu0 %v1582
        %1602 = vmatprep.subr.bf16.mxu0 0
        %1603 = vmatpush1.bf16.msra.mxu0 %v1583
        %1604 = vmatprep.subr.bf16.mxu0 0
        %1605 = vmatpush1.bf16.msra.mxu0 %v1584
        %1606 = vmatprep.subr.bf16.mxu0 0
        %1607 = vmatpush1.bf16.msra.mxu0 %v1585
        %1608 = vmatprep.subr.bf16.mxu0 0
        %1609 = vmatpush1.bf16.msra.mxu0 %v1586
        %1610 = vmatprep.subr.bf16.mxu0 0
        %1611 = vmatpush1.bf16.msra.mxu0 %v1587
        %1612 = vmatprep.subr.bf16.mxu0 0
        %1613 = vmatpush1.bf16.msra.mxu0 0
        %1614 = vmatprep.subr.bf16.mxu0 0
        %1615 = vmatpush1.bf16.msra.mxu0 0
        %1616 = vmatprep.subr.bf16.mxu0 0
        %1617 = vmatpush1.bf16.msra.mxu0 0
        %1618 = vmatprep.subr.bf16.mxu0 0
        %1619 = vmatpush1.bf16.msra.mxu0 0
        %1620 = vmatprep.subr.bf16.mxu0 0
        %1621 = vmatpush1.bf16.msra.mxu0 0
        %1622 = vmatprep.subr.bf16.mxu0 0
        %1623 = vmatpush1.bf16.msra.mxu0 0
        %1624 = vmatprep.subr.bf16.mxu0 0
        %1625 = vmatpush1.bf16.msra.mxu0 0
        %1626 = vmatprep.subr.bf16.mxu0 0
        %1627 = vmatpush1.bf16.msra.mxu0 0
        %1628 = vmatprep.mubr.bf16.mxu0 0
        %1629 = vmatmul.mubr.bf16.gmra.mrb[0].mxu0 %v1517
        %v1630 = vpop.f32.mrb[0].mxu0
        %v1631 = vadd.f32 %v1546, %v1630
        %v1632 = vpop.f32.mrb[0].mxu0
        %v1633 = vpop.f32.mrb[0].mxu0
        %v1634 = vadd.f32 %v1546, %v1633
        %v1635 = vpop.f32.mrb[0].mxu0
        %1636 = vmatprep.mubr.bf16.mxu0 0
        %1637 = vmatmul.mubr.bf16.gmra.mrb[0].mxu0 %v1518
        %v1638 = vpop.f32.mrb[0].mxu0
        %v1639 = vadd.f32 %v1546, %v1638
        %v1640 = vpop.f32.mrb[0].mxu0
        %v1641 = vpop.f32.mrb[0].mxu0
        %v1642 = vadd.f32 %v1546, %v1641
        %v1643 = vpop.f32.mrb[0].mxu0
        %1644 = vmatprep.mubr.bf16.mxu0 0
        %1645 = vmatmul.mubr.bf16.gmra.mrb[0].mxu0 %v1519
        %v1646 = vpop.f32.mrb[0].mxu0
        %v1647 = vadd.f32 %v1546, %v1646
        %v1648 = vpop.f32.mrb[0].mxu0
        %v1649 = vpop.f32.mrb[0].mxu0
        %v1650 = vadd.f32 %v1546, %v1649
        %v1651 = vpop.f32.mrb[0].mxu0
        %1652 = vmatprep.mubr.bf16.mxu0 0
        %1653 = vmatmul.mubr.bf16.gmra.mrb[0].mxu0 %v1520
        %v1654 = vpop.f32.mrb[0].mxu0
        %v1655 = vadd.f32 %v1546, %v1654
        %v1656 = vpop.f32.mrb[0].mxu0
        %v1657 = vpop.f32.mrb[0].mxu0
        %v1658 = vadd.f32 %v1546, %v1657
        %v1659 = vpop.f32.mrb[0].mxu0
        %1660 = vmatprep.mubr.bf16.mxu0 0
        %1661 = vmatmul.mubr.bf16.gmra.mrb[0].mxu0 %v1521
        %v1662 = vpop.f32.mrb[0].mxu0
        %v1663 = vadd.f32 %v1546, %v1662
        %v1664 = vpop.f32.mrb[0].mxu0
        %v1665 = vpop.f32.mrb[0].mxu0
        %v1666 = vadd.f32 %v1546, %v1665
        %v1667 = vpop.f32.mrb[0].mxu0
        %1668 = vmatprep.mubr.bf16.mxu0 0
        %1669 = vmatmul.mubr.bf16.gmra.mrb[0].mxu0 %v1522
        %v1670 = vpop.f32.mrb[0].mxu0
        %v1671 = vadd.f32 %v1546, %v1670
        %v1672 = vpop.f32.mrb[0].mxu0
        %v1673 = vpop.f32.mrb[0].mxu0
        %v1674 = vadd.f32 %v1546, %v1673
        %v1675 = vpop.f32.mrb[0].mxu0
        %1676 = vmatprep.mubr.bf16.mxu0 0
        %1677 = vmatmul.mubr.bf16.gmra.mrb[0].mxu0 %v1523
        %v1678 = vpop.f32.mrb[0].mxu0
        %v1679 = vadd.f32 %v1546, %v1678
        %v1680 = vpop.f32.mrb[0].mxu0
        %v1681 = vpop.f32.mrb[0].mxu0
        %v1682 = vadd.f32 %v1546, %v1681
        %v1683 = vpop.f32.mrb[0].mxu0
        %1684 = vmatprep.mubr.bf16.mxu0 0
        %1685 = vmatmul.mubr.bf16.gmra.mrb[0].mxu0 %v1524
        %v1686 = vpop.f32.mrb[0].mxu0
        %v1687 = vadd.f32 %v1546, %v1686
        %v1688 = vpop.f32.mrb[0].mxu0
        %v1689 = vpop.f32.mrb[0].mxu0
        %v1690 = vadd.f32 %v1546, %v1689
        %v1691 = vpop.f32.mrb[0].mxu0
        %1692 = vdwg.mxu0
        %v1693 = vmul.f32 %v1631, 0.5
        %v1694 = vmul.f32 %v1634, 0.5
        %v1695 = vmul.f32 %v1639, 0.5
        %v1696 = vmul.f32 %v1642, 0.5
        %v1697 = vmul.f32 %v1647, 0.5
        %v1698 = vmul.f32 %v1650, 0.5
        %v1699 = vmul.f32 %v1655, 0.5
        %v1700 = vmul.f32 %v1658, 0.5
        %v1701 = vmul.f32 %v1663, 0.5
        %v1702 = vmul.f32 %v1666, 0.5
        %v1703 = vmul.f32 %v1671, 0.5
        %v1704 = vmul.f32 %v1674, 0.5
        %v1705 = vmul.f32 %v1679, 0.5
        %v1706 = vmul.f32 %v1682, 0.5
        %v1707 = vmul.f32 %v1687, 0.5
        %v1708 = vmul.f32 %v1690, 0.5
        %v1709 = vmul.f32 %v1631, 0.044715
        %v1710 = vmul.f32 %v1634, 0.044715
        %v1711 = vmul.f32 %v1639, 0.044715
        %v1712 = vmul.f32 %v1642, 0.044715
        %v1713 = vmul.f32 %v1647, 0.044715
        %v1714 = vmul.f32 %v1650, 0.044715
        %v1715 = vmul.f32 %v1655, 0.044715
        %v1716 = vmul.f32 %v1658, 0.044715
        %v1717 = vmul.f32 %v1663, 0.044715
        %v1718 = vmul.f32 %v1666, 0.044715
        %v1719 = vmul.f32 %v1671, 0.044715
        %v1720 = vmul.f32 %v1674, 0.044715
        %v1721 = vmul.f32 %v1679, 0.044715
        %v1722 = vmul.f32 %v1682, 0.044715
        %v1723 = vmul.f32 %v1687, 0.044715
        %v1724 = vmul.f32 %v1690, 0.044715
        %v1725 = vmul.f32 %v1709, %v1631
        %v1726 = vmul.f32 %v1710, %v1634
        %v1727 = vmul.f32 %v1711, %v1639
        %v1728 = vmul.f32 %v1712, %v1642
        %v1729 = vmul.f32 %v1713, %v1647
        %v1730 = vmul.f32 %v1714, %v1650
        %v1731 = vmul.f32 %v1715, %v1655
        %v1732 = vmul.f32 %v1716, %v1658
        %v1733 = vmul.f32 %v1717, %v1663
        %v1734 = vmul.f32 %v1718, %v1666
        %v1735 = vmul.f32 %v1719, %v1671
        %v1736 = vmul.f32 %v1720, %v1674
        %v1737 = vmul.f32 %v1721, %v1679
        %v1738 = vmul.f32 %v1722, %v1682
        %v1739 = vmul.f32 %v1723, %v1687
        %v1740 = vmul.f32 %v1724, %v1690
        %v1741 = vmul.f32 %v1725, %v1631
        %v1742 = vmul.f32 %v1726, %v1634
        %v1743 = vmul.f32 %v1727, %v1639
        %v1744 = vmul.f32 %v1728, %v1642
        %v1745 = vmul.f32 %v1729, %v1647
        %v1746 = vmul.f32 %v1730, %v1650
        %v1747 = vmul.f32 %v1731, %v1655
        %v1748 = vmul.f32 %v1732, %v1658
        %v1749 = vmul.f32 %v1733, %v1663
        %v1750 = vmul.f32 %v1734, %v1666
        %v1751 = vmul.f32 %v1735, %v1671
        %v1752 = vmul.f32 %v1736, %v1674
        %v1753 = vmul.f32 %v1737, %v1679
        %v1754 = vmul.f32 %v1738, %v1682
        %v1755 = vmul.f32 %v1739, %v1687
        %v1756 = vmul.f32 %v1740, %v1690
        %v1757 = vadd.f32 %v1631, %v1741
        %v1758 = vadd.f32 %v1634, %v1742
        %v1759 = vadd.f32 %v1639, %v1743
        %v1760 = vadd.f32 %v1642, %v1744
        %v1761 = vadd.f32 %v1647, %v1745
        %v1762 = vadd.f32 %v1650, %v1746
        %v1763 = vadd.f32 %v1655, %v1747
        %v1764 = vadd.f32 %v1658, %v1748
        %v1765 = vadd.f32 %v1663, %v1749
        %v1766 = vadd.f32 %v1666, %v1750
        %v1767 = vadd.f32 %v1671, %v1751
        %v1768 = vadd.f32 %v1674, %v1752
        %v1769 = vadd.f32 %v1679, %v1753
        %v1770 = vadd.f32 %v1682, %v1754
        %v1771 = vadd.f32 %v1687, %v1755
        %v1772 = vadd.f32 %v1690, %v1756
        %v1773 = vmul.f32 %v1757, 0.7978846
        %v1774 = vmul.f32 %v1758, 0.7978846
        %v1775 = vmul.f32 %v1759, 0.7978846
        %v1776 = vmul.f32 %v1760, 0.7978846
        %v1777 = vmul.f32 %v1761, 0.7978846
        %v1778 = vmul.f32 %v1762, 0.7978846
        %v1779 = vmul.f32 %v1763, 0.7978846
        %v1780 = vmul.f32 %v1764, 0.7978846
        %v1781 = vmul.f32 %v1765, 0.7978846
        %v1782 = vmul.f32 %v1766, 0.7978846
        %v1783 = vmul.f32 %v1767, 0.7978846
        %v1784 = vmul.f32 %v1768, 0.7978846
        %v1785 = vmul.f32 %v1769, 0.7978846
        %v1786 = vmul.f32 %v1770, 0.7978846
        %v1787 = vmul.f32 %v1771, 0.7978846
        %v1788 = vmul.f32 %v1772, 0.7978846
        %v1789 = vtanh.pop %v1773
        %v1790 = vtanh.pop %v1774
        %v1791 = vtanh.pop %v1775
        %v1792 = vtanh.pop %v1776
        %v1793 = vtanh.pop %v1777
        %v1794 = vtanh.pop %v1778
        %v1795 = vtanh.pop %v1779
        %v1796 = vtanh.pop %v1780
        %v1797 = vtanh.pop %v1781
        %v1798 = vtanh.pop %v1782
        %v1799 = vtanh.pop %v1783
        %v1800 = vtanh.pop %v1784
        %v1801 = vtanh.pop %v1785
        %v1802 = vtanh.pop %v1786
        %v1803 = vtanh.pop %v1787
        %v1804 = vtanh.pop %v1788
        %v1805 = vadd.f32 %v1789, 1.0
        %v1806 = vadd.f32 %v1790, 1.0
        %v1807 = vadd.f32 %v1791, 1.0
        %v1808 = vadd.f32 %v1792, 1.0
        %v1809 = vadd.f32 %v1793, 1.0
        %v1810 = vadd.f32 %v1794, 1.0
        %v1811 = vadd.f32 %v1795, 1.0
        %v1812 = vadd.f32 %v1796, 1.0
        %v1813 = vadd.f32 %v1797, 1.0
        %v1814 = vadd.f32 %v1798, 1.0
        %v1815 = vadd.f32 %v1799, 1.0
        %v1816 = vadd.f32 %v1800, 1.0
        %v1817 = vadd.f32 %v1801, 1.0
        %v1818 = vadd.f32 %v1802, 1.0
        %v1819 = vadd.f32 %v1803, 1.0
        %v1820 = vadd.f32 %v1804, 1.0
        %v1821 = vmul.f32 %v1693, %v1805
        %v1822 = vmul.f32 %v1694, %v1806
        %v1823 = vmul.f32 %v1695, %v1807
        %v1824 = vmul.f32 %v1696, %v1808
        %v1825 = vmul.f32 %v1697, %v1809
        %v1826 = vmul.f32 %v1698, %v1810
        %v1827 = vmul.f32 %v1699, %v1811
        %v1828 = vmul.f32 %v1700, %v1812
        %v1829 = vmul.f32 %v1701, %v1813
        %v1830 = vmul.f32 %v1702, %v1814
        %v1831 = vmul.f32 %v1703, %v1815
        %v1832 = vmul.f32 %v1704, %v1816
        %v1833 = vmul.f32 %v1705, %v1817
        %v1834 = vmul.f32 %v1706, %v1818
        %v1835 = vmul.f32 %v1707, %v1819
        %v1836 = vmul.f32 %v1708, %v1820
        %v1837 = vpack.c.bf16 %v1822, %v1821
        %v1838 = vpack.c.bf16 %v1824, %v1823
        %v1839 = vpack.c.bf16 %v1826, %v1825
        %v1840 = vpack.c.bf16 %v1828, %v1827
        %v1841 = vpack.c.bf16 %v1830, %v1829
        %v1842 = vpack.c.bf16 %v1832, %v1831
        %v1843 = vpack.c.bf16 %v1834, %v1833
        %v1844 = vpack.c.bf16 %v1836, %v1835
        %v1845 = vld [vmem:[#allocation14] sm:$0xf]
        %v1846 = vld [vmem:[#allocation14 + $0x4] sm:$0xf]
        %v1847 = vld [vmem:[#allocation14 + $0x8] sm:$0xf]
        %v1848 = vld [vmem:[#allocation14 + $0xc] sm:$0xf]
        %v1849 = vld [vmem:[#allocation14 + $0x10] sm:$0xf]
        %v1850 = vld [vmem:[#allocation14 + $0x14] sm:$0xf]
        %v1851 = vld [vmem:[#allocation14 + $0x18] sm:$0xf]
        %v1852 = vld [vmem:[#allocation14 + $0x1c] sm:$0xf]
        %v1853 = vld [vmem:[#allocation14 + $0x20] sm:$0xf]
        %v1854 = vld [vmem:[#allocation14 + $0x24] sm:$0xf]
        %v1855 = vld [vmem:[#allocation14 + $0x28] sm:$0xf]
        %v1856 = vld [vmem:[#allocation14 + $0x2c] sm:$0xf]
        %v1857 = vld [vmem:[#allocation14 + $0x30] sm:$0xf]
        %v1858 = vld [vmem:[#allocation14 + $0x34] sm:$0xf]
        %v1859 = vld [vmem:[#allocation14 + $0x38] sm:$0xf]
        %v1860 = vld [vmem:[#allocation14 + $0x3c] sm:$0xf]
        %v1861 = vld [vmem:[%s12] sm:$0x1]
        %v1863 = vlaneseq
        %v1864 = vshrl.u32 %v1863, 7
        %v1865 = vsub.s32 0, %v1864
        %v1866 = vrot.slane %v1861, %v1865
        %v1884 = vunpack.c.l.b16 %v1845
        %v1885 = vunpack.c.l.b16 %v1846
        %v1886 = vunpack.c.l.b16 %v1847
        %v1887 = vunpack.c.l.b16 %v1848
        %v1888 = vunpack.c.l.b16 %v1849
        %v1889 = vunpack.c.l.b16 %v1850
        %v1890 = vunpack.c.l.b16 %v1851
        %v1891 = vunpack.c.l.b16 %v1852
        %v1892 = vunpack.c.l.b16 %v1853
        %v1893 = vunpack.c.l.b16 %v1854
        %v1894 = vunpack.c.l.b16 %v1855
        %v1895 = vunpack.c.l.b16 %v1856
        %v1896 = vunpack.c.l.b16 %v1857
        %v1897 = vunpack.c.l.b16 %v1858
        %v1898 = vunpack.c.l.b16 %v1859
        %v1899 = vunpack.c.l.b16 %v1860
        %v1900 = vpack.c.b16 %v1885, %v1884
        %v1901 = vpack.c.b16 %v1887, %v1886
        %v1902 = vpack.c.b16 %v1889, %v1888
        %v1903 = vpack.c.b16 %v1891, %v1890
        %v1904 = vpack.c.b16 %v1893, %v1892
        %v1905 = vpack.c.b16 %v1895, %v1894
        %v1906 = vpack.c.b16 %v1897, %v1896
        %v1907 = vpack.c.b16 %v1899, %v1898
        %1916 = vmatprep.subr.bf16.mxu0 0
        %1917 = vmatpush1.bf16.msra.mxu0 %v1900
        %1918 = vmatprep.subr.bf16.mxu0 0
        %1919 = vmatpush1.bf16.msra.mxu0 %v1901
        %1920 = vmatprep.subr.bf16.mxu0 0
        %1921 = vmatpush1.bf16.msra.mxu0 %v1902
        %1922 = vmatprep.subr.bf16.mxu0 0
        %1923 = vmatpush1.bf16.msra.mxu0 %v1903
        %1924 = vmatprep.subr.bf16.mxu0 0
        %1925 = vmatpush1.bf16.msra.mxu0 %v1904
        %1926 = vmatprep.subr.bf16.mxu0 0
        %1927 = vmatpush1.bf16.msra.mxu0 %v1905
        %1928 = vmatprep.subr.bf16.mxu0 0
        %1929 = vmatpush1.bf16.msra.mxu0 %v1906
        %1930 = vmatprep.subr.bf16.mxu0 0
        %1931 = vmatpush1.bf16.msra.mxu0 %v1907
        %1932 = vmatprep.subr.bf16.mxu0 0
        %1933 = vmatpush1.bf16.msra.mxu0 0
        %1934 = vmatprep.subr.bf16.mxu0 0
        %1935 = vmatpush1.bf16.msra.mxu0 0
        %1936 = vmatprep.subr.bf16.mxu0 0
        %1937 = vmatpush1.bf16.msra.mxu0 0
        %1938 = vmatprep.subr.bf16.mxu0 0
        %1939 = vmatpush1.bf16.msra.mxu0 0
        %1940 = vmatprep.subr.bf16.mxu0 0
        %1941 = vmatpush1.bf16.msra.mxu0 0
        %1942 = vmatprep.subr.bf16.mxu0 0
        %1943 = vmatpush1.bf16.msra.mxu0 0
        %1944 = vmatprep.subr.bf16.mxu0 0
        %1945 = vmatpush1.bf16.msra.mxu0 0
        %1946 = vmatprep.subr.bf16.mxu0 0
        %1947 = vmatpush1.bf16.msra.mxu0 0
        %1948 = vmatprep.mubr.bf16.mxu0 0
        %1949 = vmatmul.mubr.bf16.gmra.mrb[0].mxu0 %v1837
        %v1950 = vpop.f32.mrb[0].mxu0
        %v1951 = vadd.f32 %v1866, %v1950
        %v1952 = vpop.f32.mrb[0].mxu0
        %v1953 = vpop.f32.mrb[0].mxu0
        %v1954 = vadd.f32 %v1866, %v1953
        %v1955 = vpop.f32.mrb[0].mxu0
        %1956 = vmatprep.mubr.bf16.mxu0 0
        %1957 = vmatmul.mubr.bf16.gmra.mrb[0].mxu0 %v1838
        %v1958 = vpop.f32.mrb[0].mxu0
        %v1959 = vadd.f32 %v1866, %v1958
        %v1960 = vpop.f32.mrb[0].mxu0
        %v1961 = vpop.f32.mrb[0].mxu0
        %v1962 = vadd.f32 %v1866, %v1961
        %v1963 = vpop.f32.mrb[0].mxu0
        %1964 = vmatprep.mubr.bf16.mxu0 0
        %1965 = vmatmul.mubr.bf16.gmra.mrb[0].mxu0 %v1839
        %v1966 = vpop.f32.mrb[0].mxu0
        %v1967 = vadd.f32 %v1866, %v1966
        %v1968 = vpop.f32.mrb[0].mxu0
        %v1969 = vpop.f32.mrb[0].mxu0
        %v1970 = vadd.f32 %v1866, %v1969
        %v1971 = vpop.f32.mrb[0].mxu0
        %1972 = vmatprep.mubr.bf16.mxu0 0
        %1973 = vmatmul.mubr.bf16.gmra.mrb[0].mxu0 %v1840
        %v1974 = vpop.f32.mrb[0].mxu0
        %v1975 = vadd.f32 %v1866, %v1974
        %v1976 = vpop.f32.mrb[0].mxu0
        %v1977 = vpop.f32.mrb[0].mxu0
        %v1978 = vadd.f32 %v1866, %v1977
        %v1979 = vpop.f32.mrb[0].mxu0
        %1980 = vmatprep.mubr.bf16.mxu0 0
        %1981 = vmatmul.mubr.bf16.gmra.mrb[0].mxu0 %v1841
        %v1982 = vpop.f32.mrb[0].mxu0
        %v1983 = vadd.f32 %v1866, %v1982
        %v1984 = vpop.f32.mrb[0].mxu0
        %v1985 = vpop.f32.mrb[0].mxu0
        %v1986 = vadd.f32 %v1866, %v1985
        %v1987 = vpop.f32.mrb[0].mxu0
        %1988 = vmatprep.mubr.bf16.mxu0 0
        %1989 = vmatmul.mubr.bf16.gmra.mrb[0].mxu0 %v1842
        %v1990 = vpop.f32.mrb[0].mxu0
        %v1991 = vadd.f32 %v1866, %v1990
        %v1992 = vpop.f32.mrb[0].mxu0
        %v1993 = vpop.f32.mrb[0].mxu0
        %v1994 = vadd.f32 %v1866, %v1993
        %v1995 = vpop.f32.mrb[0].mxu0
        %1996 = vmatprep.mubr.bf16.mxu0 0
        %1997 = vmatmul.mubr.bf16.gmra.mrb[0].mxu0 %v1843
        %v1998 = vpop.f32.mrb[0].mxu0
        %v1999 = vadd.f32 %v1866, %v1998
        %v2000 = vpop.f32.mrb[0].mxu0
        %v2001 = vpop.f32.mrb[0].mxu0
        %v2002 = vadd.f32 %v1866, %v2001
        %v2003 = vpop.f32.mrb[0].mxu0
        %2004 = vmatprep.mubr.bf16.mxu0 0
        %2005 = vmatmul.mubr.bf16.gmra.mrb[0].mxu0 %v1844
        %v2006 = vpop.f32.mrb[0].mxu0
        %v2007 = vadd.f32 %v1866, %v2006
        %v2008 = vpop.f32.mrb[0].mxu0
        %v2009 = vpop.f32.mrb[0].mxu0
        %v2010 = vadd.f32 %v1866, %v2009
        %v2011 = vpop.f32.mrb[0].mxu0
        %2012 = vdwg.mxu0
        %v2013 = vadd.f32 %v1155, %v1951
        %v2014 = vadd.f32 %v1156, %v1954
        %v2015 = vadd.f32 %v1157, %v1959
        %v2016 = vadd.f32 %v1158, %v1962
        %v2017 = vadd.f32 %v1201, %v1967
        %v2018 = vadd.f32 %v1202, %v1970
        %v2019 = vadd.f32 %v1203, %v1975
        %v2020 = vadd.f32 %v1204, %v1978
        %v2021 = vadd.f32 %v1247, %v1983
        %v2022 = vadd.f32 %v1248, %v1986
        %v2023 = vadd.f32 %v1249, %v1991
        %v2024 = vadd.f32 %v1250, %v1994
        %v2025 = vadd.f32 %v1293, %v1999
        %v2026 = vadd.f32 %v1294, %v2002
        %v2027 = vadd.f32 %v1295, %v2007
        %v2028 = vadd.f32 %v1296, %v2010
        %v2029 = vpack.c.bf16 %v2014, %v2013
        %v2030 = vpack.c.bf16 %v2016, %v2015
        %v2033 = vunpack.c.l.b16 %v2029
        %v2034 = vunpack.c.h.b16 %v2029
        %v2035 = vunpack.c.l.b16 %v2030
        %v2036 = vunpack.c.h.b16 %v2030
        %v2037 = vpack.c.b16 %v2033, %v2033
        %v2038 = vpack.c.b16 %v2034, %v2034
        %v2039 = vpack.c.b16 %v2035, %v2035
        %v2040 = vpack.c.b16 %v2036, %v2036
        %2045 = vst [vmem:[%s540] sm:$0xf] %v2037
        %2046 = vst [vmem:[%s540 + $0x10] sm:$0xf] %v2038
        %2047 = vst [vmem:[%s540 + $0x20] sm:$0xf] %v2039
        %2048 = vst [vmem:[%s540 + $0x30] sm:$0xf] %v2040
        %v2049 = vpack.c.bf16 %v2018, %v2017
        %v2050 = vpack.c.bf16 %v2020, %v2019
        %v2053 = vunpack.c.l.b16 %v2049
        %v2054 = vunpack.c.h.b16 %v2049
        %v2055 = vunpack.c.l.b16 %v2050
        %v2056 = vunpack.c.h.b16 %v2050
        %v2057 = vpack.c.b16 %v2053, %v2053
        %v2058 = vpack.c.b16 %v2054, %v2054
        %v2059 = vpack.c.b16 %v2055, %v2055
        %v2060 = vpack.c.b16 %v2056, %v2056
        %2065 = vst [vmem:[%s540 + $0x4] sm:$0xf] %v2057
        %2066 = vst [vmem:[%s540 + $0x14] sm:$0xf] %v2058
        %2067 = vst [vmem:[%s540 + $0x24] sm:$0xf] %v2059
        %2068 = vst [vmem:[%s540 + $0x34] sm:$0xf] %v2060
        %v2069 = vpack.c.bf16 %v2022, %v2021
        %v2070 = vpack.c.bf16 %v2024, %v2023
        %v2073 = vunpack.c.l.b16 %v2069
        %v2074 = vunpack.c.h.b16 %v2069
        %v2075 = vunpack.c.l.b16 %v2070
        %v2076 = vunpack.c.h.b16 %v2070
        %v2077 = vpack.c.b16 %v2073, %v2073
        %v2078 = vpack.c.b16 %v2074, %v2074
        %v2079 = vpack.c.b16 %v2075, %v2075
        %v2080 = vpack.c.b16 %v2076, %v2076
        %2085 = vst [vmem:[%s540 + $0x8] sm:$0xf] %v2077
        %2086 = vst [vmem:[%s540 + $0x18] sm:$0xf] %v2078
        %2087 = vst [vmem:[%s540 + $0x28] sm:$0xf] %v2079
        %2088 = vst [vmem:[%s540 + $0x38] sm:$0xf] %v2080
        %v2089 = vpack.c.bf16 %v2026, %v2025
        %v2090 = vpack.c.bf16 %v2028, %v2027
        %v2093 = vunpack.c.l.b16 %v2089
        %v2094 = vunpack.c.h.b16 %v2089
        %v2095 = vunpack.c.l.b16 %v2090
        %v2096 = vunpack.c.h.b16 %v2090
        %v2097 = vpack.c.b16 %v2093, %v2093
        %v2098 = vpack.c.b16 %v2094, %v2094
        %v2099 = vpack.c.b16 %v2095, %v2095
        %v2100 = vpack.c.b16 %v2096, %v2096
        %2105 = vst [vmem:[%s540 + $0xc] sm:$0xf] %v2097
        %2106 = vst [vmem:[%s540 + $0x1c] sm:$0xf] %v2098
        %2107 = vst [vmem:[%s540 + $0x2c] sm:$0xf] %v2099
        %2108 = vst [vmem:[%s540 + $0x3c] sm:$0xf] %v2100
        %s2109 = sand.u32 %s320, 1
        %s2110 = scalar_lea.sflag [#allocation4], %s2109
        %s2111 = sand.u32 %s320, 1
        %s2112 = smul.addr %s2111, 64
        %s2113 = scalar_lea.vmem [#allocation15], %s2112
        // Predicated region
        $region101: #{tpu_custom_call.1} parent=71 // pred_check
          %p2114 = pneg %p330
        $region102: #{tpu_custom_call.1} parent=71 // pred_check_branch
          %2116 = sbr.rel (%p2114) target = $region104
        $region103: #{tpu_custom_call.1} parent=71 // pred_region
          %s2117 = smul.u32 4, %s34
          %s2119 = ssub.s32 1024, 1024
          %2120 = vsyncadd %s2110, %s2119
          %s2121 = smul.addr %s2117, 4
          %s2122 = smul.addr %s2121, 64
          %s2123 = scalar_lea.hbm %s13, %s2122
          %s2124 = sshll.u32 %s2113, 4
          %s2125 = int_to_ptr.vmem [resolvable:$true] %s2124
          %2130 = dma.vmem_to_hbm [thread:$0]  %s2125, 1024, %s2123, %s2110, 256, 256, 16
        $region104: #{tpu_custom_call.1} parent=71 // pred_fallthru
          _
      $region72: #{tpu_custom_call.1} parent=5 // pred_fallthru
        _
      %p2131 = scmp.le.s32.totalorder 2, %s29
      // Predicated region
      $region105: #{tpu_custom_call.1} parent=5 // pred_check
        %p2132 = pneg %p2131
      $region106: #{tpu_custom_call.1} parent=5 // pred_check_branch
        %2134 = sbr.rel (%p2132) target = $region108
      $region107: #{tpu_custom_call.1} parent=5 // pred_region
        %s2135 = ssub.s32 %s29, 2
        // Predicated region
        $region109: #{tpu_custom_call.1} parent=107 // pred_check
          %p2136 = pneg %p336
        $region110: #{tpu_custom_call.1} parent=107 // pred_check_branch
          %2138 = sbr.rel (%p2136) target = $region112
        $region111: #{tpu_custom_call.1} parent=107 // pred_region
          %s2139 = sand.u32 %s321, 1
          %s2140 = scalar_lea.sflag [#allocation4], %s2139
          %s2141 = sand.u32 %s321, 1
          %s2142 = smul.addr %s2141, 64
          %s2143 = scalar_lea.vmem [#allocation15], %s2142
          %2144 = dma.done %s2140, 1024
        $region112: #{tpu_custom_call.1} parent=107 // pred_fallthru
          _
      $region108: #{tpu_custom_call.1} parent=5 // pred_fallthru
        _
    $region6: #{tpu_custom_call.1} parent=1 // loop_footer
      %s33 = sadd.s32 1, %s29
    $region7: #{tpu_custom_call.1} parent=1 // loop_footer_branch
      %28 = sbr.rel target = $region3
    $region8: #{tpu_custom_call.1} parent=1 // loop_exit
      _
    %2145 = vsyncpa [#allocation3], 1
    %s2146 = scalar_lea.sflag [#allocation3], 1
    %2147 = vsyncpa %s2146, 1
    %2148 = vsyncpa [#allocation13], 1
    %2149 = vsyncpa [#allocation4], 1
    %s2150 = scalar_lea.sflag [#allocation4], 1
    %2151 = vsyncpa %s2150, 1
    %2152 = vsyncpa [#allocation5], 1
    %s2153 = scalar_lea.sflag [#allocation5], 1
    %2154 = vsyncpa %s2153, 1
    %2155 = vsyncpa [#allocation8], 1
    %2156 = vsyncpa [#allocation11], 1

</llo_original>
